<compile_context>
chip_gen: v7x
topology: tpu7x:2x2x1
jax: 0.10.0
libtpu: 0.0.40
codegen_flags: <defaults>
</compile_context>

<pallas_src>
import functools

import jax
import jax.numpy as jnp
from jax import lax
from jax.experimental import pallas as pl
from jax.experimental.pallas import tpu as pltpu

_NEG_BIG = -1e9
_POS_BIG = 1e9
_CHUNK = 8      # anchors per fori_loop step (static inner unroll)


def _batch_all_kernel(xg_ref,      # (G, D)    f32   anchor-group slab (pipelined)
                      x_ref,       # (Bp, D)   f32   full embeddings (grid invariant)
                      glab_ref,    # (G, 1)    int32 anchor-group labels (column)
                      lrow_ref,    # (1, Bp)   int32 labels, row orientation
                      gnorm_ref,   # (G, 1)    f32   anchor-group squared norms (column)
                      nrow_ref,    # (1, Bp)   f32   squared norms, row orientation
                      out_ref,     # (1, 2, Bp) f32  partial [sum; count] for this group
                      dp_scr,      # (G, Bp)   f32   VMEM: masked positive dists + margin
                      dn_scr,      # (G, Bp)   f32   VMEM: masked negative dists
                      *, margin, squared, eps, valid_b):
    G, _ = xg_ref.shape
    Bp = x_ref.shape[0]
    g0 = pl.program_id(0) * G                       # first anchor index of this group

    xg = xg_ref[...]                                # (G, D)
    x = x_ref[...]                                  # (Bp, D)
    ng_col = gnorm_ref[...]                         # (G, 1)  precomputed ||a||^2
    nrow = nrow_ref[...]                            # (1, Bp) precomputed ||x||^2

    # Single MXU pass: anchor-group x batch pairwise distances, lane dense.
    cor = lax.dot_general(xg, x, (((1,), (1,)), ((), ())),
                          preferred_element_type=jnp.float32)     # (G, Bp)
    d = jnp.maximum(ng_col - 2.0 * cor + nrow, 0.0)               # (G, Bp)
    if not squared:
        z = (d == 0.0).astype(jnp.float32)
        d = jnp.sqrt(d + z * eps) * (1.0 - z)

    # Hoisted per-group masks, all in the lane-dense (G, Bp) orientation.
    glab = glab_ref[...]                                          # (G, 1)
    lab_row = lrow_ref[...]                                       # (1, Bp)
    cand_idx = lax.broadcasted_iota(jnp.int32, (1, Bp), 1)        # candidate index (lanes)
    anchor_idx = g0 + lax.broadcasted_iota(jnp.int32, (G, 1), 0)  # absolute anchor index
    cand_valid = cand_idx < valid_b
    anchor_valid = anchor_idx < valid_b

    pos = (glab == lab_row) & (anchor_idx != cand_idx) & cand_valid & anchor_valid
    neg = (glab != lab_row) & cand_valid
    # Invalid pairs are pushed far past the relu threshold instead of applying
    # a separate (Bp, Bp) mask multiply per triplet tile.
    dp_scr[...] = jnp.where(pos, d + margin, _NEG_BIG)            # (G, Bp)
    dn_scr[...] = jnp.where(neg, d, _POS_BIG)                     # (G, Bp)

    def chunk_body(c, carry):
        sum_vec, cnt_vec = carry
        base = pl.multiple_of(c * _CHUNK, _CHUNK)
        dp_rows = dp_scr[pl.ds(base, _CHUNK), :]                  # (CH, Bp) sublane-dyn slice
        dn_rows = dn_scr[pl.ds(base, _CHUNK), :]                  # (CH, Bp)
        dp_cols = dp_rows.T                                       # (Bp, CH) one vreg transpose
        for jj in range(_CHUNK):                                  # static -> fully unrolled
            d_p = dp_cols[:, jj:jj + 1]                           # (Bp, 1)
            d_n = dn_rows[jj:jj + 1, :]                           # (1, Bp)
            tl = jnp.maximum(d_p - d_n, 0.0)                      # (Bp, Bp) triplet tile
            sum_vec = sum_vec + jnp.sum(tl, axis=0, keepdims=True)
            cnt_vec = cnt_vec + jnp.sum((tl > 1e-16).astype(jnp.float32),
                                        axis=0, keepdims=True)
        return sum_vec, cnt_vec

    init = (jnp.zeros((1, Bp), jnp.float32), jnp.zeros((1, Bp), jnp.float32))
    sum_vec, cnt_vec = lax.fori_loop(0, G // _CHUNK, chunk_body, init)

    out_ref[:, 0:1, :] = sum_vec.reshape((1, 1, Bp))
    out_ref[:, 1:2, :] = cnt_vec.reshape((1, 1, Bp))


def _chip_vmem_bytes():
    try:
        return int(pltpu.get_tpu_info().vmem_capacity_bytes)
    except Exception:
        return 64 * 2**20   # conservative: v7x per-TensorCore VMEM


def hard_triplet_loss(embeddings, labels, *, margin=0.1, squared=False,
                      eps=1e-16, group=64):
    """Batch-all hard triplet loss (hardest=False path of HardTripletLoss)."""
    B, D = embeddings.shape
    Bp = max(128, ((B + 127) // 128) * 128)      # lane-dense padding
    # Anchor-group size: big enough to feed the MXU / amortise per-step
    # overhead, but keep >= 2 groups so v7x's two TensorCores split the grid.
    G = min(int(group), Bp // 2)
    G = max(_CHUNK, (G // _CHUNK) * _CHUNK)
    while Bp % G:
        G -= _CHUNK
    num_groups = Bp // G

    x = embeddings.astype(jnp.float32)
    lab = labels.astype(jnp.int32)
    if Bp != B:
        x = jnp.pad(x, ((0, Bp - B), (0, 0)))
        lab = jnp.pad(lab, (0, Bp - B), constant_values=-1)
    norms = jnp.sum(x * x, axis=1)                                 # (Bp,)

    kernel = functools.partial(_batch_all_kernel, margin=float(margin),
                               squared=bool(squared), eps=float(eps),
                               valid_b=int(B))

    # Live set: double-buffered anchor slab + resident embeddings, the two
    # (G,Bp) scratch tiles, a few (G,Bp) temporaries and one (Bp,Bp) tile of
    # headroom.  Clamped to the chip's real VMEM (64 MiB/TC on v7x).
    est = (2 * G * D + 2 * Bp * D + 6 * G * Bp + Bp * Bp + 8 * Bp) * 4 + (4 << 20)
    chip_vmem = _chip_vmem_bytes()
    vmem_limit = int(max(16 * 2**20,
                         min(max(est, 32 * 2**20), chip_vmem - 8 * 2**20)))

    grid_spec = pltpu.PrefetchScalarGridSpec(
        num_scalar_prefetch=0,
        grid=(num_groups,),
        in_specs=[
            pl.BlockSpec((G, D), lambda g: (g, 0)),     # anchor-group embeddings
            pl.BlockSpec((Bp, D), lambda g: (0, 0)),    # full embeddings (resident)
            pl.BlockSpec((G, 1), lambda g: (g, 0)),     # anchor-group labels (col)
            pl.BlockSpec((1, Bp), lambda g: (0, 0)),    # labels (row)
            pl.BlockSpec((G, 1), lambda g: (g, 0)),     # anchor-group norms (col)
            pl.BlockSpec((1, Bp), lambda g: (0, 0)),    # norms (row)
        ],
        out_specs=pl.BlockSpec((1, 2, Bp), lambda g: (g, 0, 0)),
        scratch_shapes=[pltpu.VMEM((G, Bp), jnp.float32),
                        pltpu.VMEM((G, Bp), jnp.float32)],
    )

    partials = pl.pallas_call(
        kernel,
        grid_spec=grid_spec,
        out_shape=jax.ShapeDtypeStruct((num_groups, 2, Bp), jnp.float32),
        compiler_params=pltpu.CompilerParams(
            dimension_semantics=("parallel",),
            vmem_limit_bytes=vmem_limit),
    )(x, x, lab.reshape(Bp, 1), lab.reshape(1, Bp),
      norms.reshape(Bp, 1), norms.reshape(1, Bp))

    # Per-lane partial counts are small integers; the grand total stays well
    # below 2^24 for any realistic batch, so these f32 sums are exact.
    total = jnp.sum(partials[:, 0, :])
    cnt = jnp.sum(partials[:, 1, :])
    return total / (cnt + 1e-16)


def _reference_loss(embeddings, labels, margin=0.1, squared=False, eps=1e-16):
    """Pure-JAX reference mirroring the PyTorch module (hardest=False)."""
    x = embeddings.astype(jnp.float32)
    cor = x @ x.T
    norm = jnp.diag(cor)
    dist = jnp.maximum(norm[:, None] - 2.0 * cor + norm[None, :], 0.0)
    if not squared:
        zmask = (dist == 0.0).astype(jnp.float32)
        dist = jnp.sqrt(dist + zmask * eps) * (1.0 - zmask)
    B = labels.shape[0]
    loss = dist[:, :, None] - dist[:, None, :] + margin
    neq = ~jnp.eye(B, dtype=bool)
    lab_eq = labels[None, :] == labels[:, None]
    distinct = neq[:, :, None] & neq[:, None, :] & neq[None, :, :]
    valid = lab_eq[:, :, None] & (~lab_eq)[:, None, :]
    mask = (distinct & valid).astype(jnp.float32)
    tl = jnp.maximum(loss * mask, 0.0)
    n_hard = jnp.sum((tl > 1e-16).astype(jnp.float32))
    return jnp.sum(tl) / (n_hard + 1e-16)


if __name__ == "__main__":
    key = jax.random.PRNGKey(0)
    k1, k2, k3, k4 = jax.random.split(key, 4)

    # Case 1: canonical small shape (batch=8, embed_dim=32).
    B, D = 8, 32
    emb = jax.random.normal(k1, (B, D), dtype=jnp.float32)
    lab = jax.random.randint(k2, (B,), 0, 3, dtype=jnp.int32)
    out = jax.block_until_ready(hard_triplet_loss(emb, lab, margin=0.1))
    ref = _reference_loss(emb, lab, margin=0.1)
    assert jnp.allclose(out, ref, rtol=1e-3, atol=1e-3), (out, ref)

    # Case 2: ragged batch (exercises padding and partially-valid anchor groups).
    B2, D2 = 23, 40
    emb2 = jax.random.normal(k3, (B2, D2), dtype=jnp.float32)
    lab2 = jax.random.randint(k4, (B2,), 0, 4, dtype=jnp.int32)
    out2 = jax.block_until_ready(hard_triplet_loss(emb2, lab2, margin=0.1))
    ref2 = _reference_loss(emb2, lab2, margin=0.1)
    assert jnp.allclose(out2, ref2, rtol=1e-3, atol=1e-3), (out2, ref2)

    print("KERNEL_OK")
</pallas_src>

<mosaic_0001>
module attributes {stable_mosaic.version = 11 : i64} {
  func.func @_batch_all_kernel(%arg0: i32, %arg1: memref<64x32xf32, #tpu.memory_space<vmem>>, %arg2: memref<128x32xf32, #tpu.memory_space<vmem>>, %arg3: memref<64x1xi32, #tpu.memory_space<vmem>>, %arg4: memref<1x128xi32, #tpu.memory_space<vmem>>, %arg5: memref<64x1xf32, #tpu.memory_space<vmem>>, %arg6: memref<1x128xf32, #tpu.memory_space<vmem>>, %arg7: memref<1x2x128xf32, #tpu.memory_space<vmem>>, %arg8: memref<64x128xf32, #tpu.memory_space<vmem>>, %arg9: memref<64x128xf32, #tpu.memory_space<vmem>>) attributes {dimension_semantics = [#tpu.dimension_semantics<parallel>], iteration_bounds = array<i64: 2>, scalar_prefetch = 0 : i64, scratch_operands = 2 : i64, tpu.core_type = #tpu.core_type<tc>, window_params = [{transform_indices = @transform_0, window_bounds = array<i64: 64, 32>}, {pipeline_mode = #tpu.pipeline_mode<synchronous>, transform_indices = @transform_1, window_bounds = array<i64: 128, 32>}, {transform_indices = @transform_2, window_bounds = array<i64: 64, 1>}, {pipeline_mode = #tpu.pipeline_mode<synchronous>, transform_indices = @transform_3, window_bounds = array<i64: 1, 128>}, {transform_indices = @transform_4, window_bounds = array<i64: 64, 1>}, {pipeline_mode = #tpu.pipeline_mode<synchronous>, transform_indices = @transform_5, window_bounds = array<i64: 1, 128>}, {transform_indices = @transform_6, window_bounds = array<i64: 1, 2, 128>}]} {
    %c64_i32 = arith.constant 64 : i32
    %0 = arith.muli %arg0, %c64_i32 : i32
    %c0 = arith.constant 0 : index
    %c0_0 = arith.constant 0 : index
    %1 = vector.load %arg1[%c0, %c0_0] : memref<64x32xf32, #tpu.memory_space<vmem>>, vector<64x32xf32>
    %c0_1 = arith.constant 0 : index
    %c0_2 = arith.constant 0 : index
    %2 = vector.load %arg2[%c0_1, %c0_2] : memref<128x32xf32, #tpu.memory_space<vmem>>, vector<128x32xf32>
    %c0_3 = arith.constant 0 : index
    %c0_4 = arith.constant 0 : index
    %3 = vector.load %arg5[%c0_3, %c0_4] : memref<64x1xf32, #tpu.memory_space<vmem>>, vector<64x1xf32>
    %c0_5 = arith.constant 0 : index
    %c0_6 = arith.constant 0 : index
    %4 = vector.load %arg6[%c0_5, %c0_6] : memref<1x128xf32, #tpu.memory_space<vmem>>, vector<1x128xf32>
    %cst = arith.constant dense<0.000000e+00> : vector<64x128xf32>
    %5 = tpu.matmul %1, %2, %cst {dimension_numbers = #tpu.dot_dimension_numbers<[1], [1], [0], [0], [0, 0, 1, 0], [], []>} : vector<64x32xf32>, vector<128x32xf32>, vector<64x128xf32> -> vector<64x128xf32>
    %cst_7 = arith.constant 2.000000e+00 : f32
    %6 = vector.broadcast %cst_7 : f32 to vector<64x128xf32>
    %7 = arith.mulf %6, %5 : vector<64x128xf32>
    %8 = vector.broadcast %3 : vector<64x1xf32> to vector<64x128xf32>
    %9 = arith.subf %8, %7 : vector<64x128xf32>
    %10 = vector.broadcast %4 : vector<1x128xf32> to vector<64x128xf32>
    %11 = arith.addf %9, %10 : vector<64x128xf32>
    %cst_8 = arith.constant 0.000000e+00 : f32
    %12 = vector.broadcast %cst_8 : f32 to vector<64x128xf32>
    %13 = arith.maximumf %11, %12 : vector<64x128xf32>
    %cst_9 = arith.constant 0.000000e+00 : f32
    %14 = vector.broadcast %cst_9 : f32 to vector<64x128xf32>
    %15 = arith.cmpf oeq, %13, %14 : vector<64x128xf32>
    %16 = arith.extui %15 : vector<64x128xi1> to vector<64x128xi32>
    %17 = arith.sitofp %16 : vector<64x128xi32> to vector<64x128xf32>
    %cst_10 = arith.constant 1.000000e-16 : f32
    %18 = vector.broadcast %cst_10 : f32 to vector<64x128xf32>
    %19 = arith.mulf %17, %18 : vector<64x128xf32>
    %20 = arith.addf %13, %19 : vector<64x128xf32>
    %21 = math.sqrt %20 : vector<64x128xf32>
    %cst_11 = arith.constant 1.000000e+00 : f32
    %22 = vector.broadcast %cst_11 : f32 to vector<64x128xf32>
    %23 = arith.subf %22, %17 : vector<64x128xf32>
    %24 = arith.mulf %21, %23 : vector<64x128xf32>
    %c0_12 = arith.constant 0 : index
    %c0_13 = arith.constant 0 : index
    %25 = vector.load %arg3[%c0_12, %c0_13] : memref<64x1xi32, #tpu.memory_space<vmem>>, vector<64x1xi32>
    %c0_14 = arith.constant 0 : index
    %c0_15 = arith.constant 0 : index
    %26 = vector.load %arg4[%c0_14, %c0_15] : memref<1x128xi32, #tpu.memory_space<vmem>>, vector<1x128xi32>
    %27 = tpu.iota {dimensions = array<i32: 1>} : vector<1x128xi32>
    %28 = tpu.iota {dimensions = array<i32: 0>} : vector<64x1xi32>
    %29 = vector.broadcast %0 : i32 to vector<64x1xi32>
    %30 = arith.addi %29, %28 : vector<64x1xi32>
    %c8_i32 = arith.constant 8 : i32
    %31 = vector.broadcast %c8_i32 : i32 to vector<1x128xi32>
    %32 = arith.cmpi slt, %27, %31 : vector<1x128xi32>
    %c8_i32_16 = arith.constant 8 : i32
    %33 = vector.broadcast %c8_i32_16 : i32 to vector<64x1xi32>
    %34 = arith.cmpi slt, %30, %33 : vector<64x1xi32>
    %35 = vector.broadcast %25 : vector<64x1xi32> to vector<64x128xi32>
    %36 = vector.broadcast %26 : vector<1x128xi32> to vector<64x128xi32>
    %37 = arith.cmpi eq, %35, %36 : vector<64x128xi32>
    %38 = vector.broadcast %30 : vector<64x1xi32> to vector<64x128xi32>
    %39 = vector.broadcast %27 : vector<1x128xi32> to vector<64x128xi32>
    %40 = arith.cmpi ne, %38, %39 : vector<64x128xi32>
    %41 = arith.andi %37, %40 : vector<64x128xi1>
    %42 = vector.broadcast %32 : vector<1x128xi1> to vector<64x128xi1>
    %43 = arith.andi %41, %42 : vector<64x128xi1>
    %44 = vector.broadcast %34 : vector<64x1xi1> to vector<64x128xi1>
    %45 = arith.andi %43, %44 : vector<64x128xi1>
    %46 = vector.broadcast %25 : vector<64x1xi32> to vector<64x128xi32>
    %47 = vector.broadcast %26 : vector<1x128xi32> to vector<64x128xi32>
    %48 = arith.cmpi ne, %46, %47 : vector<64x128xi32>
    %49 = vector.broadcast %32 : vector<1x128xi1> to vector<64x128xi1>
    %50 = arith.andi %48, %49 : vector<64x128xi1>
    %cst_17 = arith.constant 1.000000e-01 : f32
    %51 = vector.broadcast %cst_17 : f32 to vector<64x128xf32>
    %52 = arith.addf %24, %51 : vector<64x128xf32>
    %cst_18 = arith.constant -1.000000e+09 : f32
    %53 = vector.broadcast %cst_18 : f32 to vector<64x128xf32>
    %54 = arith.select %45, %52, %53 : vector<64x128xi1>, vector<64x128xf32>
    %c0_19 = arith.constant 0 : index
    %c0_20 = arith.constant 0 : index
    %55 = vector.load %arg8[%c0_19, %c0_20] : memref<64x128xf32, #tpu.memory_space<vmem>>, vector<64x128xf32>
    tpu.vector_store %arg8[%c0_19, %c0_20], %54 {strides = array<i32>} : memref<64x128xf32, #tpu.memory_space<vmem>>, vector<64x128xf32>,
    %cst_21 = arith.constant 1.000000e+09 : f32
    %56 = vector.broadcast %cst_21 : f32 to vector<64x128xf32>
    %57 = arith.select %50, %24, %56 : vector<64x128xi1>, vector<64x128xf32>
    %c0_22 = arith.constant 0 : index
    %c0_23 = arith.constant 0 : index
    %58 = vector.load %arg9[%c0_22, %c0_23] : memref<64x128xf32, #tpu.memory_space<vmem>>, vector<64x128xf32>
    tpu.vector_store %arg9[%c0_22, %c0_23], %57 {strides = array<i32>} : memref<64x128xf32, #tpu.memory_space<vmem>>, vector<64x128xf32>,
    %cst_24 = arith.constant 0.000000e+00 : f32
    %59 = vector.broadcast %cst_24 : f32 to vector<1x128xf32>
    %cst_25 = arith.constant 0.000000e+00 : f32
    %60 = vector.broadcast %cst_25 : f32 to vector<1x128xf32>
    %c0_i32 = arith.constant 0 : i32
    %c8_i32_26 = arith.constant 8 : i32
    %61 = arith.addi %c0_i32, %c8_i32_26 : i32
    %c1_i32 = arith.constant 1 : i32
    %62:2 = scf.for %arg10 = %c0_i32 to %61 step %c1_i32 iter_args(%arg11 = %59, %arg12 = %60) -> (vector<1x128xf32>, vector<1x128xf32>)  : i32 {
      %c8_i32_33 = arith.constant 8 : i32
      %67 = arith.muli %arg10, %c8_i32_33 : i32
      %68 = tpu.assume_multiple %67, 8 : i32
      %69 = arith.index_cast %68 : i32 to index
      %c0_34 = arith.constant 0 : index
      %70 = vector.load %arg8[%69, %c0_34] : memref<64x128xf32, #tpu.memory_space<vmem>>, vector<8x128xf32>
      %71 = arith.index_cast %68 : i32 to index
      %c0_35 = arith.constant 0 : index
      %72 = vector.load %arg9[%71, %c0_35] : memref<64x128xf32, #tpu.memory_space<vmem>>, vector<8x128xf32>
      %73 = tpu.transpose %70, [1, 0] : vector<8x128xf32> -> vector<128x8xf32>
      %74 = vector.extract_strided_slice %73 {offsets = [0, 0], sizes = [128, 1], strides = [1, 1]} : vector<128x8xf32> to vector<128x1xf32>
      %75 = vector.extract_strided_slice %72 {offsets = [0, 0], sizes = [1, 128], strides = [1, 1]} : vector<8x128xf32> to vector<1x128xf32>
      %76 = vector.broadcast %74 : vector<128x1xf32> to vector<128x128xf32>
      %77 = vector.broadcast %75 : vector<1x128xf32> to vector<128x128xf32>
      %78 = arith.subf %76, %77 : vector<128x128xf32>
      %cst_36 = arith.constant 0.000000e+00 : f32
      %79 = vector.broadcast %cst_36 : f32 to vector<128x128xf32>
      %80 = arith.maximumf %78, %79 : vector<128x128xf32>
      %cst_37 = arith.constant dense<0.000000e+00> : vector<128xf32>
      %81 = vector.multi_reduction <add>, %80, %cst_37 [0] : vector<128x128xf32> to vector<128xf32>
      %82 = vector.shape_cast %81 : vector<128xf32> to vector<1x128xf32>
      %83 = arith.addf %arg11, %82 : vector<1x128xf32>
      %cst_38 = arith.constant 1.000000e-16 : f32
      %84 = vector.broadcast %cst_38 : f32 to vector<128x128xf32>
      %85 = arith.cmpf ogt, %80, %84 : vector<128x128xf32>
      %86 = arith.extui %85 : vector<128x128xi1> to vector<128x128xi32>
      %87 = arith.sitofp %86 : vector<128x128xi32> to vector<128x128xf32>
      %cst_39 = arith.constant dense<0.000000e+00> : vector<128xf32>
      %88 = vector.multi_reduction <add>, %87, %cst_39 [0] : vector<128x128xf32> to vector<128xf32>
      %89 = vector.shape_cast %88 : vector<128xf32> to vector<1x128xf32>
      %90 = arith.addf %arg12, %89 : vector<1x128xf32>
      %91 = vector.extract_strided_slice %73 {offsets = [0, 1], sizes = [128, 1], strides = [1, 1]} : vector<128x8xf32> to vector<128x1xf32>
      %92 = vector.extract_strided_slice %72 {offsets = [1, 0], sizes = [1, 128], strides = [1, 1]} : vector<8x128xf32> to vector<1x128xf32>
      %93 = vector.broadcast %91 : vector<128x1xf32> to vector<128x128xf32>
      %94 = vector.broadcast %92 : vector<1x128xf32> to vector<128x128xf32>
      %95 = arith.subf %93, %94 : vector<128x128xf32>
      %cst_40 = arith.constant 0.000000e+00 : f32
      %96 = vector.broadcast %cst_40 : f32 to vector<128x128xf32>
      %97 = arith.maximumf %95, %96 : vector<128x128xf32>
      %cst_41 = arith.constant dense<0.000000e+00> : vector<128xf32>
      %98 = vector.multi_reduction <add>, %97, %cst_41 [0] : vector<128x128xf32> to vector<128xf32>
      %99 = vector.shape_cast %98 : vector<128xf32> to vector<1x128xf32>
      %100 = arith.addf %83, %99 : vector<1x128xf32>
      %cst_42 = arith.constant 1.000000e-16 : f32
      %101 = vector.broadcast %cst_42 : f32 to vector<128x128xf32>
      %102 = arith.cmpf ogt, %97, %101 : vector<128x128xf32>
      %103 = arith.extui %102 : vector<128x128xi1> to vector<128x128xi32>
      %104 = arith.sitofp %103 : vector<128x128xi32> to vector<128x128xf32>
      %cst_43 = arith.constant dense<0.000000e+00> : vector<128xf32>
      %105 = vector.multi_reduction <add>, %104, %cst_43 [0] : vector<128x128xf32> to vector<128xf32>
      %106 = vector.shape_cast %105 : vector<128xf32> to vector<1x128xf32>
      %107 = arith.addf %90, %106 : vector<1x128xf32>
      %108 = vector.extract_strided_slice %73 {offsets = [0, 2], sizes = [128, 1], strides = [1, 1]} : vector<128x8xf32> to vector<128x1xf32>
      %109 = vector.extract_strided_slice %72 {offsets = [2, 0], sizes = [1, 128], strides = [1, 1]} : vector<8x128xf32> to vector<1x128xf32>
      %110 = vector.broadcast %108 : vector<128x1xf32> to vector<128x128xf32>
      %111 = vector.broadcast %109 : vector<1x128xf32> to vector<128x128xf32>
      %112 = arith.subf %110, %111 : vector<128x128xf32>
      %cst_44 = arith.constant 0.000000e+00 : f32
      %113 = vector.broadcast %cst_44 : f32 to vector<128x128xf32>
      %114 = arith.maximumf %112, %113 : vector<128x128xf32>
      %cst_45 = arith.constant dense<0.000000e+00> : vector<128xf32>
      %115 = vector.multi_reduction <add>, %114, %cst_45 [0] : vector<128x128xf32> to vector<128xf32>
      %116 = vector.shape_cast %115 : vector<128xf32> to vector<1x128xf32>
      %117 = arith.addf %100, %116 : vector<1x128xf32>
      %cst_46 = arith.constant 1.000000e-16 : f32
      %118 = vector.broadcast %cst_46 : f32 to vector<128x128xf32>
      %119 = arith.cmpf ogt, %114, %118 : vector<128x128xf32>
      %120 = arith.extui %119 : vector<128x128xi1> to vector<128x128xi32>
      %121 = arith.sitofp %120 : vector<128x128xi32> to vector<128x128xf32>
      %cst_47 = arith.constant dense<0.000000e+00> : vector<128xf32>
      %122 = vector.multi_reduction <add>, %121, %cst_47 [0] : vector<128x128xf32> to vector<128xf32>
      %123 = vector.shape_cast %122 : vector<128xf32> to vector<1x128xf32>
      %124 = arith.addf %107, %123 : vector<1x128xf32>
      %125 = vector.extract_strided_slice %73 {offsets = [0, 3], sizes = [128, 1], strides = [1, 1]} : vector<128x8xf32> to vector<128x1xf32>
      %126 = vector.extract_strided_slice %72 {offsets = [3, 0], sizes = [1, 128], strides = [1, 1]} : vector<8x128xf32> to vector<1x128xf32>
      %127 = vector.broadcast %125 : vector<128x1xf32> to vector<128x128xf32>
      %128 = vector.broadcast %126 : vector<1x128xf32> to vector<128x128xf32>
      %129 = arith.subf %127, %128 : vector<128x128xf32>
      %cst_48 = arith.constant 0.000000e+00 : f32
      %130 = vector.broadcast %cst_48 : f32 to vector<128x128xf32>
      %131 = arith.maximumf %129, %130 : vector<128x128xf32>
      %cst_49 = arith.constant dense<0.000000e+00> : vector<128xf32>
      %132 = vector.multi_reduction <add>, %131, %cst_49 [0] : vector<128x128xf32> to vector<128xf32>
      %133 = vector.shape_cast %132 : vector<128xf32> to vector<1x128xf32>
      %134 = arith.addf %117, %133 : vector<1x128xf32>
      %cst_50 = arith.constant 1.000000e-16 : f32
      %135 = vector.broadcast %cst_50 : f32 to vector<128x128xf32>
      %136 = arith.cmpf ogt, %131, %135 : vector<128x128xf32>
      %137 = arith.extui %136 : vector<128x128xi1> to vector<128x128xi32>
      %138 = arith.sitofp %137 : vector<128x128xi32> to vector<128x128xf32>
      %cst_51 = arith.constant dense<0.000000e+00> : vector<128xf32>
      %139 = vector.multi_reduction <add>, %138, %cst_51 [0] : vector<128x128xf32> to vector<128xf32>
      %140 = vector.shape_cast %139 : vector<128xf32> to vector<1x128xf32>
      %141 = arith.addf %124, %140 : vector<1x128xf32>
      %142 = vector.extract_strided_slice %73 {offsets = [0, 4], sizes = [128, 1], strides = [1, 1]} : vector<128x8xf32> to vector<128x1xf32>
      %143 = vector.extract_strided_slice %72 {offsets = [4, 0], sizes = [1, 128], strides = [1, 1]} : vector<8x128xf32> to vector<1x128xf32>
      %144 = vector.broadcast %142 : vector<128x1xf32> to vector<128x128xf32>
      %145 = vector.broadcast %143 : vector<1x128xf32> to vector<128x128xf32>
      %146 = arith.subf %144, %145 : vector<128x128xf32>
      %cst_52 = arith.constant 0.000000e+00 : f32
      %147 = vector.broadcast %cst_52 : f32 to vector<128x128xf32>
      %148 = arith.maximumf %146, %147 : vector<128x128xf32>
      %cst_53 = arith.constant dense<0.000000e+00> : vector<128xf32>
      %149 = vector.multi_reduction <add>, %148, %cst_53 [0] : vector<128x128xf32> to vector<128xf32>
      %150 = vector.shape_cast %149 : vector<128xf32> to vector<1x128xf32>
      %151 = arith.addf %134, %150 : vector<1x128xf32>
      %cst_54 = arith.constant 1.000000e-16 : f32
      %152 = vector.broadcast %cst_54 : f32 to vector<128x128xf32>
      %153 = arith.cmpf ogt, %148, %152 : vector<128x128xf32>
      %154 = arith.extui %153 : vector<128x128xi1> to vector<128x128xi32>
      %155 = arith.sitofp %154 : vector<128x128xi32> to vector<128x128xf32>
      %cst_55 = arith.constant dense<0.000000e+00> : vector<128xf32>
      %156 = vector.multi_reduction <add>, %155, %cst_55 [0] : vector<128x128xf32> to vector<128xf32>
      %157 = vector.shape_cast %156 : vector<128xf32> to vector<1x128xf32>
      %158 = arith.addf %141, %157 : vector<1x128xf32>
      %159 = vector.extract_strided_slice %73 {offsets = [0, 5], sizes = [128, 1], strides = [1, 1]} : vector<128x8xf32> to vector<128x1xf32>
      %160 = vector.extract_strided_slice %72 {offsets = [5, 0], sizes = [1, 128], strides = [1, 1]} : vector<8x128xf32> to vector<1x128xf32>
      %161 = vector.broadcast %159 : vector<128x1xf32> to vector<128x128xf32>
      %162 = vector.broadcast %160 : vector<1x128xf32> to vector<128x128xf32>
      %163 = arith.subf %161, %162 : vector<128x128xf32>
      %cst_56 = arith.constant 0.000000e+00 : f32
      %164 = vector.broadcast %cst_56 : f32 to vector<128x128xf32>
      %165 = arith.maximumf %163, %164 : vector<128x128xf32>
      %cst_57 = arith.constant dense<0.000000e+00> : vector<128xf32>
      %166 = vector.multi_reduction <add>, %165, %cst_57 [0] : vector<128x128xf32> to vector<128xf32>
      %167 = vector.shape_cast %166 : vector<128xf32> to vector<1x128xf32>
      %168 = arith.addf %151, %167 : vector<1x128xf32>
      %cst_58 = arith.constant 1.000000e-16 : f32
      %169 = vector.broadcast %cst_58 : f32 to vector<128x128xf32>
      %170 = arith.cmpf ogt, %165, %169 : vector<128x128xf32>
      %171 = arith.extui %170 : vector<128x128xi1> to vector<128x128xi32>
      %172 = arith.sitofp %171 : vector<128x128xi32> to vector<128x128xf32>
      %cst_59 = arith.constant dense<0.000000e+00> : vector<128xf32>
      %173 = vector.multi_reduction <add>, %172, %cst_59 [0] : vector<128x128xf32> to vector<128xf32>
      %174 = vector.shape_cast %173 : vector<128xf32> to vector<1x128xf32>
      %175 = arith.addf %158, %174 : vector<1x128xf32>
      %176 = vector.extract_strided_slice %73 {offsets = [0, 6], sizes = [128, 1], strides = [1, 1]} : vector<128x8xf32> to vector<128x1xf32>
      %177 = vector.extract_strided_slice %72 {offsets = [6, 0], sizes = [1, 128], strides = [1, 1]} : vector<8x128xf32> to vector<1x128xf32>
      %178 = vector.broadcast %176 : vector<128x1xf32> to vector<128x128xf32>
      %179 = vector.broadcast %177 : vector<1x128xf32> to vector<128x128xf32>
      %180 = arith.subf %178, %179 : vector<128x128xf32>
      %cst_60 = arith.constant 0.000000e+00 : f32
      %181 = vector.broadcast %cst_60 : f32 to vector<128x128xf32>
      %182 = arith.maximumf %180, %181 : vector<128x128xf32>
      %cst_61 = arith.constant dense<0.000000e+00> : vector<128xf32>
      %183 = vector.multi_reduction <add>, %182, %cst_61 [0] : vector<128x128xf32> to vector<128xf32>
      %184 = vector.shape_cast %183 : vector<128xf32> to vector<1x128xf32>
      %185 = arith.addf %168, %184 : vector<1x128xf32>
      %cst_62 = arith.constant 1.000000e-16 : f32
      %186 = vector.broadcast %cst_62 : f32 to vector<128x128xf32>
      %187 = arith.cmpf ogt, %182, %186 : vector<128x128xf32>
      %188 = arith.extui %187 : vector<128x128xi1> to vector<128x128xi32>
      %189 = arith.sitofp %188 : vector<128x128xi32> to vector<128x128xf32>
      %cst_63 = arith.constant dense<0.000000e+00> : vector<128xf32>
      %190 = vector.multi_reduction <add>, %189, %cst_63 [0] : vector<128x128xf32> to vector<128xf32>
      %191 = vector.shape_cast %190 : vector<128xf32> to vector<1x128xf32>
      %192 = arith.addf %175, %191 : vector<1x128xf32>
      %193 = vector.extract_strided_slice %73 {offsets = [0, 7], sizes = [128, 1], strides = [1, 1]} : vector<128x8xf32> to vector<128x1xf32>
      %194 = vector.extract_strided_slice %72 {offsets = [7, 0], sizes = [1, 128], strides = [1, 1]} : vector<8x128xf32> to vector<1x128xf32>
      %195 = vector.broadcast %193 : vector<128x1xf32> to vector<128x128xf32>
      %196 = vector.broadcast %194 : vector<1x128xf32> to vector<128x128xf32>
      %197 = arith.subf %195, %196 : vector<128x128xf32>
      %cst_64 = arith.constant 0.000000e+00 : f32
      %198 = vector.broadcast %cst_64 : f32 to vector<128x128xf32>
      %199 = arith.maximumf %197, %198 : vector<128x128xf32>
      %cst_65 = arith.constant dense<0.000000e+00> : vector<128xf32>
      %200 = vector.multi_reduction <add>, %199, %cst_65 [0] : vector<128x128xf32> to vector<128xf32>
      %201 = vector.shape_cast %200 : vector<128xf32> to vector<1x128xf32>
      %202 = arith.addf %185, %201 : vector<1x128xf32>
      %cst_66 = arith.constant 1.000000e-16 : f32
      %203 = vector.broadcast %cst_66 : f32 to vector<128x128xf32>
      %204 = arith.cmpf ogt, %199, %203 : vector<128x128xf32>
      %205 = arith.extui %204 : vector<128x128xi1> to vector<128x128xi32>
      %206 = arith.sitofp %205 : vector<128x128xi32> to vector<128x128xf32>
      %cst_67 = arith.constant dense<0.000000e+00> : vector<128xf32>
      %207 = vector.multi_reduction <add>, %206, %cst_67 [0] : vector<128x128xf32> to vector<128xf32>
      %208 = vector.shape_cast %207 : vector<128xf32> to vector<1x128xf32>
      %209 = arith.addf %192, %208 : vector<1x128xf32>
      scf.yield %202, %209 : vector<1x128xf32>, vector<1x128xf32>
    }
    %c8_i32_27 = arith.constant 8 : i32
    %63 = vector.shape_cast %62#0 : vector<1x128xf32> to vector<1x1x128xf32>
    %c0_28 = arith.constant 0 : index
    %c0_29 = arith.constant 0 : index
    %c0_30 = arith.constant 0 : index
    %64 = vector.load %arg7[%c0_28, %c0_29, %c0_30] : memref<1x2x128xf32, #tpu.memory_space<vmem>>, vector<1x1x128xf32>
    tpu.vector_store %arg7[%c0_28, %c0_29, %c0_30], %63 {strides = array<i32>} : memref<1x2x128xf32, #tpu.memory_space<vmem>>, vector<1x1x128xf32>,
    %65 = vector.shape_cast %62#1 : vector<1x128xf32> to vector<1x1x128xf32>
    %c0_31 = arith.constant 0 : index
    %c1 = arith.constant 1 : index
    %c0_32 = arith.constant 0 : index
    %66 = vector.load %arg7[%c0_31, %c1, %c0_32] : memref<1x2x128xf32, #tpu.memory_space<vmem>>, vector<1x1x128xf32>
    tpu.vector_store %arg7[%c0_31, %c1, %c0_32], %65 {strides = array<i32>} : memref<1x2x128xf32, #tpu.memory_space<vmem>>, vector<1x1x128xf32>,
    return
  }
  func.func @transform_0(%arg0: i32) -> (i32, i32) {
    %c0_i32 = arith.constant 0 : i32
    %c0_i32_0 = arith.constant 0 : i32
    return %arg0, %c0_i32 : i32, i32
  }
  func.func @transform_1(%arg0: i32) -> (i32, i32) {
    %c0_i32 = arith.constant 0 : i32
    %c0_i32_0 = arith.constant 0 : i32
    %c0_i32_1 = arith.constant 0 : i32
    return %c0_i32, %c0_i32_0 : i32, i32
  }
  func.func @transform_2(%arg0: i32) -> (i32, i32) {
    %c0_i32 = arith.constant 0 : i32
    %c0_i32_0 = arith.constant 0 : i32
    return %arg0, %c0_i32 : i32, i32
  }
  func.func @transform_3(%arg0: i32) -> (i32, i32) {
    %c0_i32 = arith.constant 0 : i32
    %c0_i32_0 = arith.constant 0 : i32
    %c0_i32_1 = arith.constant 0 : i32
    return %c0_i32, %c0_i32_0 : i32, i32
  }
  func.func @transform_4(%arg0: i32) -> (i32, i32) {
    %c0_i32 = arith.constant 0 : i32
    %c0_i32_0 = arith.constant 0 : i32
    return %arg0, %c0_i32 : i32, i32
  }
  func.func @transform_5(%arg0: i32) -> (i32, i32) {
    %c0_i32 = arith.constant 0 : i32
    %c0_i32_0 = arith.constant 0 : i32
    %c0_i32_1 = arith.constant 0 : i32
    return %c0_i32, %c0_i32_0 : i32, i32
  }
  func.func @transform_6(%arg0: i32) -> (i32, i32, i32) {
    %c0_i32 = arith.constant 0 : i32
    %c0_i32_0 = arith.constant 0 : i32
    %c0_i32_1 = arith.constant 0 : i32
    return %arg0, %c0_i32, %c0_i32_0 : i32, i32, i32
  }
}

</mosaic_0001>

<llo_original>
// kernel: tpu_custom_call.1
$region0: #{tpu_custom_call.1}
  #allocation0 [shape = 'u32[]', space=smem, size = 0x4, offset = 0x4, fixed_abs, tag = 'smem constant byte address 0x4 - core index']
  #allocation1 [shape = 'u32[144,128]{1,0:T(1,128)}', space=vmem, size = 0x12000, scoped, tag = 'internal scratch']
  #allocation2 [shape = 'f32[64,128]{1,0:T(8,128)}', space=vmem, size = 0x8000, scoped, tag = 'scratch operand']
  #allocation3 [shape = 'f32[64,128]{1,0:T(8,128)}', space=vmem, size = 0x8000, scoped, tag = 'scratch operand']
  %s0 = inlined_call_operand.vmem [shape: f32[128,32], index: 0, kind: input, shape index: {}]
  %s1 = inlined_call_operand.vmem [shape: f32[128,32], index: 1, kind: input, shape index: {}]
  %s2 = inlined_call_operand.vmem [shape: s32[128,1], index: 2, kind: input, shape index: {}]
  %s3 = inlined_call_operand.vmem [shape: s32[1,128], index: 3, kind: input, shape index: {}]
  %s4 = inlined_call_operand.vmem [shape: f32[128,1], index: 4, kind: input, shape index: {}]
  %s5 = inlined_call_operand.vmem [shape: f32[1,128], index: 5, kind: input, shape index: {}]
  %s6 = inlined_call_operand.hbm [shape: f32[2,2,128], index: 6, kind: output, shape index: {}]
  %s7 = sld [smem:[#allocation0]]
  $region64: #{tpu_custom_call.1} parent=0
    _
  %s9 = ssub.s32 1, %s7
  %s10 = scalar_select 0, %s9, %s7
  $region1: #{tpu_custom_call.1} parent=0
    #allocation4 [shape = 'u8[2048]{0}', space=vmem, size = 0x800, scoped, tag = 'output window, operand 0']
    #allocation5 [shape = 's32[2]{0}', space=sflag, size = 0x8, scoped, tag = 'scoped memory for tpu_custom_call.1']
    %11 = vsyncpa [#allocation5], 0
    %s12 = scalar_lea.sflag [#allocation5], 1
    %13 = vsyncpa %s12, 0
    loop: start=0, step=1, limit=4
    $region2: #{tpu_custom_call.1} parent=1 // loop_pre_header
      _
    $region3: #{tpu_custom_call.1} parent=1 // loop_header
      %s15 = sphi 0, %s19
      %p16 = scmp.ge.s32.totalorder %s15, 4
      %s25 = sphi 0, %s27
      %s28 = sphi 0, %s25
      %s29 = sphi 0, %s28
      %s45 = sphi 0, %s29
      %s49 = sphi 0, %s49
      %s51 = sphi 0, %s49
      %s52 = sphi 0, %s51
      %s66 = sphi 0, %s52
      %s72 = sphi 0, %s74
      %s75 = sphi 0, %s72
      %s76 = sphi 0, %s75
      %s92 = sphi 0, %s76
      %s96 = sphi 0, %s96
      %s98 = sphi 0, %s96
      %s99 = sphi 0, %s98
      %s113 = sphi 0, %s99
      %s119 = sphi 0, %s121
      %s122 = sphi 0, %s119
      %s123 = sphi 0, %s122
      %s139 = sphi 0, %s123
      %s143 = sphi 0, %s143
      %s145 = sphi 0, %s143
      %s146 = sphi 0, %s145
      %s160 = sphi 0, %s146
      %s166 = sphi 0, %s168
      %s169 = sphi 0, %s166
      %s170 = sphi 0, %s169
      %s186 = sphi 0, %s170
    $region4: #{tpu_custom_call.1} parent=1 // loop_header_branch
      %18 = sbr.rel (%p16) target = $region8
    $region5: #{tpu_custom_call.1} parent=1 // loop_body
      %s20 = ssub.s32 %s15, 1
      %s21 = ssub.s32 %s15, 2
      %s22 = sadd.s32 %s15, 1
      %s23 = ssub.s32 %s15, %s22
      %p24 = scmp.eq.s32.totalorder %s23, 0
      %s26 = sadd.s32 %s25, 1
      %s27 = scalar_select %p24, %s25, %s26
      %p30 = pneg %p24
      %p31 = scmp.eq.s32.totalorder %s15, 1
      %p32 = por %p30, %p31
      %p33 = scmp.ne.s32.totalorder %s25, %s28
      %p34 = scmp.eq.s32.totalorder %s15, 0
      %p35 = por %p33, %p34
      %p36 = scmp.ne.s32.totalorder %s25, %s28
      %p37 = scmp.eq.s32.totalorder %s20, 1
      %p38 = por %p36, %p37
      %p39 = scmp.ne.s32.totalorder %s28, %s29
      %p40 = scmp.eq.s32.totalorder %s20, 0
      %p41 = por %p39, %p40
      %p42 = scmp.ne.s32.totalorder %s28, %s29
      %p43 = scmp.eq.s32.totalorder %s21, 1
      %p44 = por %p42, %p43
      %p46 = scmp.ne.s32.totalorder %s29, %s45
      %p47 = scmp.eq.s32.totalorder %s21, 0
      %p48 = por %p46, %p47
      %s50 = sadd.s32 %s49, 1
      %p53 = scmp.eq.s32.totalorder %s15, 1
      %p54 = scmp.ne.s32.totalorder %s49, %s51
      %p55 = scmp.eq.s32.totalorder %s15, 0
      %p56 = por %p54, %p55
      %p57 = scmp.ne.s32.totalorder %s49, %s51
      %p58 = scmp.eq.s32.totalorder %s20, 1
      %p59 = por %p57, %p58
      %p60 = scmp.ne.s32.totalorder %s51, %s52
      %p61 = scmp.eq.s32.totalorder %s20, 0
      %p62 = por %p60, %p61
      %p63 = scmp.ne.s32.totalorder %s51, %s52
      %p64 = scmp.eq.s32.totalorder %s21, 1
      %p65 = por %p63, %p64
      %p67 = scmp.ne.s32.totalorder %s52, %s66
      %p68 = scmp.eq.s32.totalorder %s21, 0
      %p69 = por %p67, %p68
      %s70 = ssub.s32 %s15, %s22
      %p71 = scmp.eq.s32.totalorder %s70, 0
      %s73 = sadd.s32 %s72, 1
      %s74 = scalar_select %p71, %s72, %s73
      %p77 = pneg %p71
      %p78 = scmp.eq.s32.totalorder %s15, 1
      %p79 = por %p77, %p78
      %p80 = scmp.ne.s32.totalorder %s72, %s75
      %p81 = scmp.eq.s32.totalorder %s15, 0
      %p82 = por %p80, %p81
      %p83 = scmp.ne.s32.totalorder %s72, %s75
      %p84 = scmp.eq.s32.totalorder %s20, 1
      %p85 = por %p83, %p84
      %p86 = scmp.ne.s32.totalorder %s75, %s76
      %p87 = scmp.eq.s32.totalorder %s20, 0
      %p88 = por %p86, %p87
      %p89 = scmp.ne.s32.totalorder %s75, %s76
      %p90 = scmp.eq.s32.totalorder %s21, 1
      %p91 = por %p89, %p90
      %p93 = scmp.ne.s32.totalorder %s76, %s92
      %p94 = scmp.eq.s32.totalorder %s21, 0
      %p95 = por %p93, %p94
      %s97 = sadd.s32 %s96, 1
      %p100 = scmp.eq.s32.totalorder %s15, 1
      %p101 = scmp.ne.s32.totalorder %s96, %s98
      %p102 = scmp.eq.s32.totalorder %s15, 0
      %p103 = por %p101, %p102
      %p104 = scmp.ne.s32.totalorder %s96, %s98
      %p105 = scmp.eq.s32.totalorder %s20, 1
      %p106 = por %p104, %p105
      %p107 = scmp.ne.s32.totalorder %s98, %s99
      %p108 = scmp.eq.s32.totalorder %s20, 0
      %p109 = por %p107, %p108
      %p110 = scmp.ne.s32.totalorder %s98, %s99
      %p111 = scmp.eq.s32.totalorder %s21, 1
      %p112 = por %p110, %p111
      %p114 = scmp.ne.s32.totalorder %s99, %s113
      %p115 = scmp.eq.s32.totalorder %s21, 0
      %p116 = por %p114, %p115
      %s117 = ssub.s32 %s15, %s22
      %p118 = scmp.eq.s32.totalorder %s117, 0
      %s120 = sadd.s32 %s119, 1
      %s121 = scalar_select %p118, %s119, %s120
      %p124 = pneg %p118
      %p125 = scmp.eq.s32.totalorder %s15, 1
      %p126 = por %p124, %p125
      %p127 = scmp.ne.s32.totalorder %s119, %s122
      %p128 = scmp.eq.s32.totalorder %s15, 0
      %p129 = por %p127, %p128
      %p130 = scmp.ne.s32.totalorder %s119, %s122
      %p131 = scmp.eq.s32.totalorder %s20, 1
      %p132 = por %p130, %p131
      %p133 = scmp.ne.s32.totalorder %s122, %s123
      %p134 = scmp.eq.s32.totalorder %s20, 0
      %p135 = por %p133, %p134
      %p136 = scmp.ne.s32.totalorder %s122, %s123
      %p137 = scmp.eq.s32.totalorder %s21, 1
      %p138 = por %p136, %p137
      %p140 = scmp.ne.s32.totalorder %s123, %s139
      %p141 = scmp.eq.s32.totalorder %s21, 0
      %p142 = por %p140, %p141
      %s144 = sadd.s32 %s143, 1
      %p147 = scmp.eq.s32.totalorder %s15, 1
      %p148 = scmp.ne.s32.totalorder %s143, %s145
      %p149 = scmp.eq.s32.totalorder %s15, 0
      %p150 = por %p148, %p149
      %p151 = scmp.ne.s32.totalorder %s143, %s145
      %p152 = scmp.eq.s32.totalorder %s20, 1
      %p153 = por %p151, %p152
      %p154 = scmp.ne.s32.totalorder %s145, %s146
      %p155 = scmp.eq.s32.totalorder %s20, 0
      %p156 = por %p154, %p155
      %p157 = scmp.ne.s32.totalorder %s145, %s146
      %p158 = scmp.eq.s32.totalorder %s21, 1
      %p159 = por %p157, %p158
      %p161 = scmp.ne.s32.totalorder %s146, %s160
      %p162 = scmp.eq.s32.totalorder %s21, 0
      %p163 = por %p161, %p162
      %s164 = ssub.s32 %s15, %s22
      %p165 = scmp.eq.s32.totalorder %s164, 0
      %s167 = sadd.s32 %s166, 1
      %s168 = scalar_select %p165, %s166, %s167
      %p171 = pneg %p165
      %p172 = scmp.eq.s32.totalorder %s15, 1
      %p173 = por %p171, %p172
      %p174 = scmp.ne.s32.totalorder %s166, %s169
      %p175 = scmp.eq.s32.totalorder %s15, 0
      %p176 = por %p174, %p175
      %p177 = scmp.ne.s32.totalorder %s166, %s169
      %p178 = scmp.eq.s32.totalorder %s20, 1
      %p179 = por %p177, %p178
      %p180 = scmp.ne.s32.totalorder %s169, %s170
      %p181 = scmp.eq.s32.totalorder %s20, 0
      %p182 = por %p180, %p181
      %p183 = scmp.ne.s32.totalorder %s169, %s170
      %p184 = scmp.eq.s32.totalorder %s21, 1
      %p185 = por %p183, %p184
      %p187 = scmp.ne.s32.totalorder %s170, %s186
      %p188 = scmp.eq.s32.totalorder %s21, 0
      %p189 = por %p187, %p188
      %p190 = scmp.le.s32.totalorder 1, %s15
      %p191 = scmp.lt.s32.totalorder %s15, 3
      %p192 = pnand %p190, %p191
      %p193 = pneg %p192
      // Predicated region
      $region9: #{tpu_custom_call.1} parent=5 // pred_check
        _
      $region10: #{tpu_custom_call.1} parent=5 // pred_check_branch
        %195 = sbr.rel (%p192) target = $region12
      $region11: #{tpu_custom_call.1} parent=5 // pred_region
        %s196 = ssub.s32 %s15, 1
        // Predicated region
        $region13: #{tpu_custom_call.1} parent=11 // pred_check
          %p197 = pneg %p62
        $region14: #{tpu_custom_call.1} parent=11 // pred_check_branch
          %199 = sbr.rel (%p197) target = $region16
        $region15: #{tpu_custom_call.1} parent=11 // pred_region
          _
        $region16: #{tpu_custom_call.1} parent=11 // pred_fallthru
          _
        // Predicated region
        $region17: #{tpu_custom_call.1} parent=11 // pred_check
          %p200 = pneg %p109
        $region18: #{tpu_custom_call.1} parent=11 // pred_check_branch
          %202 = sbr.rel (%p200) target = $region20
        $region19: #{tpu_custom_call.1} parent=11 // pred_region
          _
        $region20: #{tpu_custom_call.1} parent=11 // pred_fallthru
          _
        // Predicated region
        $region21: #{tpu_custom_call.1} parent=11 // pred_check
          %p203 = pneg %p156
        $region22: #{tpu_custom_call.1} parent=11 // pred_check_branch
          %205 = sbr.rel (%p203) target = $region24
        $region23: #{tpu_custom_call.1} parent=11 // pred_region
          _
        $region24: #{tpu_custom_call.1} parent=11 // pred_fallthru
          _
      $region12: #{tpu_custom_call.1} parent=5 // pred_fallthru
        _
      %p206 = scmp.lt.s32.totalorder %s15, 2
      // Predicated region
      $region25: #{tpu_custom_call.1} parent=5 // pred_check
        %p207 = pneg %p206
      $region26: #{tpu_custom_call.1} parent=5 // pred_check_branch
        %209 = sbr.rel (%p207) target = $region28
      $region27: #{tpu_custom_call.1} parent=5 // pred_region
        // Predicated region
        $region29: #{tpu_custom_call.1} parent=27 // pred_check
          %p210 = pneg %p35
        $region30: #{tpu_custom_call.1} parent=27 // pred_check_branch
          %212 = sbr.rel (%p210) target = $region32
        $region31: #{tpu_custom_call.1} parent=27 // pred_region
          %s213 = smul.u32 8, %s15
          %p214 = scmp.lt.s32.totalorder %s213, 15
          %s215 = scalar_select %p214, %s213, 15
          %s216 = smul.addr %s215, 8
          %s217 = scalar_lea.vmem %s0, %s216
          %s218 = smul.u32 8, %s15
        $region32: #{tpu_custom_call.1} parent=27 // pred_fallthru
          _
        // Predicated region
        $region33: #{tpu_custom_call.1} parent=27 // pred_check
          %p219 = pneg %p82
        $region34: #{tpu_custom_call.1} parent=27 // pred_check_branch
          %221 = sbr.rel (%p219) target = $region36
        $region35: #{tpu_custom_call.1} parent=27 // pred_region
          %s222 = smul.u32 8, %s15
          %p223 = scmp.lt.s32.totalorder %s222, 15
          %s224 = scalar_select %p223, %s222, 15
          %s225 = smul.addr %s224, 8
          %s226 = scalar_lea.vmem %s2, %s225
          %s227 = smul.u32 8, %s15
        $region36: #{tpu_custom_call.1} parent=27 // pred_fallthru
          _
        // Predicated region
        $region37: #{tpu_custom_call.1} parent=27 // pred_check
          %p228 = pneg %p129
        $region38: #{tpu_custom_call.1} parent=27 // pred_check_branch
          %230 = sbr.rel (%p228) target = $region40
        $region39: #{tpu_custom_call.1} parent=27 // pred_region
          %s231 = smul.u32 8, %s15
          %p232 = scmp.lt.s32.totalorder %s231, 15
          %s233 = scalar_select %p232, %s231, 15
          %s234 = smul.addr %s233, 8
          %s235 = scalar_lea.vmem %s4, %s234
          %s236 = smul.u32 8, %s15
        $region40: #{tpu_custom_call.1} parent=27 // pred_fallthru
          _
      $region28: #{tpu_custom_call.1} parent=5 // pred_fallthru
        _
      %p237 = scmp.le.s32.totalorder 1, %s15
      %p238 = scmp.lt.s32.totalorder %s15, 3
      %p239 = pnand %p237, %p238
      %p240 = pneg %p239
      // Predicated region
      $region41: #{tpu_custom_call.1} parent=5 // pred_check
        _
      $region42: #{tpu_custom_call.1} parent=5 // pred_check_branch
        %242 = sbr.rel (%p239) target = $region44
      $region43: #{tpu_custom_call.1} parent=5 // pred_region
        %s243 = ssub.s32 %s15, 1
        %s244 = smul.u32 8, %s20
        %p245 = scmp.lt.s32.totalorder %s244, 15
        %s246 = scalar_select %p245, %s244, 15
        %s247 = smul.addr %s246, 8
        %s248 = scalar_lea.vmem %s0, %s247
        %p249 = pneg %p41
        %p250 = pneg %p38
        %p251 = pneg %p62
        %p252 = pneg %p59
        %s253 = smul.u32 8, %s20
        %p254 = scmp.lt.s32.totalorder %s253, 15
        %s255 = scalar_select %p254, %s253, 15
        %s256 = smul.addr %s255, 8
        %s257 = scalar_lea.vmem %s2, %s256
        %p258 = pneg %p88
        %p259 = pneg %p85
        %p260 = pneg %p109
        %p261 = pneg %p106
        %s262 = smul.u32 8, %s20
        %p263 = scmp.lt.s32.totalorder %s262, 15
        %s264 = scalar_select %p263, %s262, 15
        %s265 = smul.addr %s264, 8
        %s266 = scalar_lea.vmem %s4, %s265
        %p267 = pneg %p135
        %p268 = pneg %p132
        %p269 = pneg %p156
        %p270 = pneg %p153
        %p271 = pneg %p182
        %p272 = pneg %p179
        %s273 = sand.u32 %s169, 1
        %s274 = scalar_lea.sflag [#allocation5], %s273
        %s275 = sand.u32 %s169, 1
        %s276 = smul.addr %s275, 2
        %s277 = scalar_lea.vmem [#allocation4], %s276
        %s278 = smul.u32 8, %s20
        %p279 = scmp.lt.s32.totalorder %s278, 15
        %s280 = scalar_select %p279, %s278, 15
        %s281 = smul.addr %s280, 8
        %s282 = scalar_lea.vmem %s0, %s281
        %s283 = smul.u32 8, %s20
        %s284 = smul.u32 8, %s20
        %p285 = scmp.lt.s32.totalorder %s284, 15
        %s286 = scalar_select %p285, %s284, 15
        %s287 = smul.addr %s286, 8
        %s288 = scalar_lea.vmem %s2, %s287
        %s289 = smul.u32 8, %s20
        %s290 = smul.u32 8, %s20
        %p291 = scmp.lt.s32.totalorder %s290, 15
        %s292 = scalar_select %p291, %s290, 15
        %s293 = smul.addr %s292, 8
        %s294 = scalar_lea.vmem %s4, %s293
        %s295 = smul.u32 8, %s20
        %s296 = smul.u32 %s20, 64
        %v297 = vld [vmem:[%s282] sm:$0xff]
        %v298 = vld [vmem:[%s282 + $0x8] sm:$0xff]
        %v299 = vld [vmem:[%s282 + $0x10] sm:$0xff]
        %v300 = vld [vmem:[%s282 + $0x18] sm:$0xff]
        %v301 = vld [vmem:[%s282 + $0x20] sm:$0xff]
        %v302 = vld [vmem:[%s282 + $0x28] sm:$0xff]
        %v303 = vld [vmem:[%s282 + $0x30] sm:$0xff]
        %v304 = vld [vmem:[%s282 + $0x38] sm:$0xff]
        %v305 = vld [vmem:[%s1] sm:$0xff]
        %v306 = vld [vmem:[%s1 + $0x8] sm:$0xff]
        %v307 = vld [vmem:[%s1 + $0x10] sm:$0xff]
        %v308 = vld [vmem:[%s1 + $0x18] sm:$0xff]
        %v309 = vld [vmem:[%s1 + $0x20] sm:$0xff]
        %v310 = vld [vmem:[%s1 + $0x28] sm:$0xff]
        %v311 = vld [vmem:[%s1 + $0x30] sm:$0xff]
        %v312 = vld [vmem:[%s1 + $0x38] sm:$0xff]
        %v313 = vld [vmem:[%s1 + $0x40] sm:$0xff]
        %v314 = vld [vmem:[%s1 + $0x48] sm:$0xff]
        %v315 = vld [vmem:[%s1 + $0x50] sm:$0xff]
        %v316 = vld [vmem:[%s1 + $0x58] sm:$0xff]
        %v317 = vld [vmem:[%s1 + $0x60] sm:$0xff]
        %v318 = vld [vmem:[%s1 + $0x68] sm:$0xff]
        %v319 = vld [vmem:[%s1 + $0x70] sm:$0xff]
        %v320 = vld [vmem:[%s1 + $0x78] sm:$0xff]
        %v321 = vld [vmem:[%s294] sm:$0xff]
        %v322 = vld [vmem:[%s294 + $0x8] sm:$0xff]
        %v323 = vld [vmem:[%s294 + $0x10] sm:$0xff]
        %v324 = vld [vmem:[%s294 + $0x18] sm:$0xff]
        %v325 = vld [vmem:[%s294 + $0x20] sm:$0xff]
        %v326 = vld [vmem:[%s294 + $0x28] sm:$0xff]
        %v327 = vld [vmem:[%s294 + $0x30] sm:$0xff]
        %v328 = vld [vmem:[%s294 + $0x38] sm:$0xff]
        %v329 = vld [vmem:[%s5] sm:$0x1]
        %vm330 = vcmask 261120
        %v332 = vsel %vm330, %v297, 0
        %v335 = vsel %vm330, %v298, 0
        %v338 = vsel %vm330, %v299, 0
        %v341 = vsel %vm330, %v300, 0
        %v344 = vsel %vm330, %v301, 0
        %v347 = vsel %vm330, %v302, 0
        %v350 = vsel %vm330, %v303, 0
        %v353 = vsel %vm330, %v304, 0
        %v356 = vsel %vm330, %v305, 0
        %v359 = vsel %vm330, %v306, 0
        %v362 = vsel %vm330, %v307, 0
        %v365 = vsel %vm330, %v308, 0
        %v368 = vsel %vm330, %v309, 0
        %v371 = vsel %vm330, %v310, 0
        %v374 = vsel %vm330, %v311, 0
        %v377 = vsel %vm330, %v312, 0
        %v380 = vsel %vm330, %v313, 0
        %v383 = vsel %vm330, %v314, 0
        %v386 = vsel %vm330, %v315, 0
        %v389 = vsel %vm330, %v316, 0
        %v392 = vsel %vm330, %v317, 0
        %v395 = vsel %vm330, %v318, 0
        %v398 = vsel %vm330, %v319, 0
        %v401 = vsel %vm330, %v320, 0
        %403 = vmatprep.subr.mxu0 0.0
        %404 = vmatpush1.xpose.msra.mxu0 %v356
        %405 = vmatprep.subr.mxu0 0.0
        %406 = vmatpush1.xpose.msra.mxu0 %v359
        %407 = vmatprep.subr.mxu0 0.0
        %408 = vmatpush1.xpose.msra.mxu0 %v362
        %409 = vmatprep.subr.mxu0 0.0
        %410 = vmatpush1.xpose.msra.mxu0 %v365
        %411 = vmatprep.subr.mxu0 0.0
        %412 = vmatpush1.xpose.msra.mxu0 %v368
        %413 = vmatprep.subr.mxu0 0.0
        %414 = vmatpush1.xpose.msra.mxu0 %v371
        %415 = vmatprep.subr.mxu0 0.0
        %416 = vmatpush1.xpose.msra.mxu0 %v374
        %417 = vmatprep.subr.mxu0 0.0
        %418 = vmatpush1.xpose.msra.mxu0 %v377
        %419 = vmatprep.subr.mxu0 0.0
        %420 = vmatpush1.xpose.msra.mxu0 %v380
        %421 = vmatprep.subr.mxu0 0.0
        %422 = vmatpush1.xpose.msra.mxu0 %v383
        %423 = vmatprep.subr.mxu0 0.0
        %424 = vmatpush1.xpose.msra.mxu0 %v386
        %425 = vmatprep.subr.mxu0 0.0
        %426 = vmatpush1.xpose.msra.mxu0 %v389
        %427 = vmatprep.subr.mxu0 0.0
        %428 = vmatpush1.xpose.msra.mxu0 %v392
        %429 = vmatprep.subr.mxu0 0.0
        %430 = vmatpush1.xpose.msra.mxu0 %v395
        %431 = vmatprep.subr.mxu0 0.0
        %432 = vmatpush1.xpose.msra.mxu0 %v398
        %433 = vmatprep.subr.mxu0 0.0
        %434 = vmatpush1.xpose.msra.mxu0 %v401
        %435 = vmatprep.subr.mxu0 0.0
        %436 = vmatpush1.xpose.msra.mxu0 0.0
        %437 = vmatprep.subr.mxu0 0.0
        %438 = vmatpush1.xpose.msra.mxu0 0.0
        %439 = vmatprep.subr.mxu0 0.0
        %440 = vmatpush1.xpose.msra.mxu0 0.0
        %441 = vmatprep.subr.mxu0 0.0
        %442 = vmatpush1.xpose.msra.mxu0 0.0
        %443 = vmatprep.subr.mxu0 0.0
        %444 = vmatpush1.xpose.msra.mxu0 0.0
        %445 = vmatprep.subr.mxu0 0.0
        %446 = vmatpush1.xpose.msra.mxu0 0.0
        %447 = vmatprep.subr.mxu0 0.0
        %448 = vmatpush1.xpose.msra.mxu0 0.0
        %449 = vmatprep.subr.mxu0 0.0
        %450 = vmatpush1.xpose.msra.mxu0 0.0
        %451 = vmatprep.subr.mxu0 0.0
        %452 = vmatpush1.xpose.msra.mxu0 0.0
        %453 = vmatprep.subr.mxu0 0.0
        %454 = vmatpush1.xpose.msra.mxu0 0.0
        %455 = vmatprep.subr.mxu0 0.0
        %456 = vmatpush1.xpose.msra.mxu0 0.0
        %457 = vmatprep.subr.mxu0 0.0
        %458 = vmatpush1.xpose.msra.mxu0 0.0
        %459 = vmatprep.subr.mxu0 0.0
        %460 = vmatpush1.xpose.msra.mxu0 0.0
        %461 = vmatprep.subr.mxu0 0.0
        %462 = vmatpush1.xpose.msra.mxu0 0.0
        %463 = vmatprep.subr.mxu0 0.0
        %464 = vmatpush1.xpose.msra.mxu0 0.0
        %465 = vmatprep.subr.mxu0 0.0
        %466 = vmatpush1.xpose.msra.mxu0 0.0
        %467 = vmatprep.mubr.f32.mxu0 0.0
        %468 = vmatmul.mubr.f32.gmra.mrb[0].mxu0 %v332
        %v469 = vpop.f32.mrb[0].mxu0
        %v470 = vadd.f32 0.0, %v469
        %v471 = vpop.f32.mrb[0].mxu0
        %472 = vmatprep.mubr.f32.mxu0 0.0
        %473 = vmatmul.mubr.f32.gmra.mrb[0].mxu0 %v335
        %v474 = vpop.f32.mrb[0].mxu0
        %v475 = vadd.f32 0.0, %v474
        %v476 = vpop.f32.mrb[0].mxu0
        %477 = vmatprep.mubr.f32.mxu0 0.0
        %478 = vmatmul.mubr.f32.gmra.mrb[0].mxu0 %v338
        %v479 = vpop.f32.mrb[0].mxu0
        %v480 = vadd.f32 0.0, %v479
        %v481 = vpop.f32.mrb[0].mxu0
        %482 = vmatprep.mubr.f32.mxu0 0.0
        %483 = vmatmul.mubr.f32.gmra.mrb[0].mxu0 %v341
        %v484 = vpop.f32.mrb[0].mxu0
        %v485 = vadd.f32 0.0, %v484
        %v486 = vpop.f32.mrb[0].mxu0
        %487 = vmatprep.mubr.f32.mxu0 0.0
        %488 = vmatmul.mubr.f32.gmra.mrb[0].mxu0 %v344
        %v489 = vpop.f32.mrb[0].mxu0
        %v490 = vadd.f32 0.0, %v489
        %v491 = vpop.f32.mrb[0].mxu0
        %492 = vmatprep.mubr.f32.mxu0 0.0
        %493 = vmatmul.mubr.f32.gmra.mrb[0].mxu0 %v347
        %v494 = vpop.f32.mrb[0].mxu0
        %v495 = vadd.f32 0.0, %v494
        %v496 = vpop.f32.mrb[0].mxu0
        %497 = vmatprep.mubr.f32.mxu0 0.0
        %498 = vmatmul.mubr.f32.gmra.mrb[0].mxu0 %v350
        %v499 = vpop.f32.mrb[0].mxu0
        %v500 = vadd.f32 0.0, %v499
        %v501 = vpop.f32.mrb[0].mxu0
        %502 = vmatprep.mubr.f32.mxu0 0.0
        %503 = vmatmul.mubr.f32.gmra.mrb[0].mxu0 %v353
        %v504 = vpop.f32.mrb[0].mxu0
        %v505 = vadd.f32 0.0, %v504
        %v506 = vpop.f32.mrb[0].mxu0
        %507 = vdwg.mxu0
        %v508 = vmul.f32 %v470, 2.0
        %v509 = vmul.f32 %v475, 2.0
        %v510 = vmul.f32 %v480, 2.0
        %v511 = vmul.f32 %v485, 2.0
        %v512 = vmul.f32 %v490, 2.0
        %v513 = vmul.f32 %v495, 2.0
        %v514 = vmul.f32 %v500, 2.0
        %v515 = vmul.f32 %v505, 2.0
        %517 = vset.pattern.permute.xlu0 0
        %518 = vperm.xlu0 %517, %v321
        %v519 = vpop.permute.xlu0 %518
        %522 = vset.pattern.permute.xlu0 0
        %523 = vperm.xlu0 %522, %v322
        %v524 = vpop.permute.xlu0 %523
        %527 = vset.pattern.permute.xlu0 0
        %528 = vperm.xlu0 %527, %v323
        %v529 = vpop.permute.xlu0 %528
        %532 = vset.pattern.permute.xlu0 0
        %533 = vperm.xlu0 %532, %v324
        %v534 = vpop.permute.xlu0 %533
        %537 = vset.pattern.permute.xlu0 0
        %538 = vperm.xlu0 %537, %v325
        %v539 = vpop.permute.xlu0 %538
        %542 = vset.pattern.permute.xlu0 0
        %543 = vperm.xlu0 %542, %v326
        %v544 = vpop.permute.xlu0 %543
        %547 = vset.pattern.permute.xlu0 0
        %548 = vperm.xlu0 %547, %v327
        %v549 = vpop.permute.xlu0 %548
        %552 = vset.pattern.permute.xlu0 0
        %553 = vperm.xlu0 %552, %v328
        %v554 = vpop.permute.xlu0 %553
        %v556 = vsub.f32 %v519, %v508
        %v557 = vsub.f32 %v524, %v509
        %v558 = vsub.f32 %v529, %v510
        %v559 = vsub.f32 %v534, %v511
        %v560 = vsub.f32 %v539, %v512
        %v561 = vsub.f32 %v544, %v513
        %v562 = vsub.f32 %v549, %v514
        %v563 = vsub.f32 %v554, %v515
        %v565 = vlaneseq
        %v566 = vshrl.u32 %v565, 7
        %v567 = vsub.s32 0, %v566
        %v568 = vrot.slane %v329, %v567
        %v570 = vadd.f32 %v556, %v568
        %v571 = vadd.f32 %v557, %v568
        %v572 = vadd.f32 %v558, %v568
        %v573 = vadd.f32 %v559, %v568
        %v574 = vadd.f32 %v560, %v568
        %v575 = vadd.f32 %v561, %v568
        %v576 = vadd.f32 %v562, %v568
        %v577 = vadd.f32 %v563, %v568
        %v578 = vmax.f32 %v570, 0.0
        %v579 = vmax.f32 %v571, 0.0
        %v580 = vmax.f32 %v572, 0.0
        %v581 = vmax.f32 %v573, 0.0
        %v582 = vmax.f32 %v574, 0.0
        %v583 = vmax.f32 %v575, 0.0
        %v584 = vmax.f32 %v576, 0.0
        %v585 = vmax.f32 %v577, 0.0
        %vm586 = vcmp.eq.f32.partialorder %v578, 0.0
        %vm587 = vcmp.eq.f32.partialorder %v579, 0.0
        %vm588 = vcmp.eq.f32.partialorder %v580, 0.0
        %vm589 = vcmp.eq.f32.partialorder %v581, 0.0
        %vm590 = vcmp.eq.f32.partialorder %v582, 0.0
        %vm591 = vcmp.eq.f32.partialorder %v583, 0.0
        %vm592 = vcmp.eq.f32.partialorder %v584, 0.0
        %vm593 = vcmp.eq.f32.partialorder %v585, 0.0
        %v594 = vsel %vm586, 1, 0
        %v595 = vsel %vm587, 1, 0
        %v596 = vsel %vm588, 1, 0
        %v597 = vsel %vm589, 1, 0
        %v598 = vsel %vm590, 1, 0
        %v599 = vsel %vm591, 1, 0
        %v600 = vsel %vm592, 1, 0
        %v601 = vsel %vm593, 1, 0
        %v602 = vcvt.s32.f32 %v594
        %v603 = vcvt.s32.f32 %v595
        %v604 = vcvt.s32.f32 %v596
        %v605 = vcvt.s32.f32 %v597
        %v606 = vcvt.s32.f32 %v598
        %v607 = vcvt.s32.f32 %v599
        %v608 = vcvt.s32.f32 %v600
        %v609 = vcvt.s32.f32 %v601
        %v610 = vmul.f32 %v602, 1e-16
        %v611 = vmul.f32 %v603, 1e-16
        %v612 = vmul.f32 %v604, 1e-16
        %v613 = vmul.f32 %v605, 1e-16
        %v614 = vmul.f32 %v606, 1e-16
        %v615 = vmul.f32 %v607, 1e-16
        %v616 = vmul.f32 %v608, 1e-16
        %v617 = vmul.f32 %v609, 1e-16
        %v618 = vadd.f32 %v578, %v610
        %v619 = vadd.f32 %v579, %v611
        %v620 = vadd.f32 %v580, %v612
        %v621 = vadd.f32 %v581, %v613
        %v622 = vadd.f32 %v582, %v614
        %v623 = vadd.f32 %v583, %v615
        %v624 = vadd.f32 %v584, %v616
        %v625 = vadd.f32 %v585, %v617
        %v626 = vrsqrt.pop %v618
        %v627 = vmul.f32 %v618, %v626
        %vm628 = vcmp.eq.f32.partialorder %v618, inf
        %v629 = vsel %vm628, %v618, %v627
        %vm630 = vcmp.eq.f32.partialorder %v618, 0.0
        %v631 = vand.u32 %v618, 2147483648
        %v632 = vsel %vm630, %v631, %v629
        %v633 = vrsqrt.pop %v619
        %v634 = vmul.f32 %v619, %v633
        %vm635 = vcmp.eq.f32.partialorder %v619, inf
        %v636 = vsel %vm635, %v619, %v634
        %vm637 = vcmp.eq.f32.partialorder %v619, 0.0
        %v638 = vand.u32 %v619, 2147483648
        %v639 = vsel %vm637, %v638, %v636
        %v640 = vrsqrt.pop %v620
        %v641 = vmul.f32 %v620, %v640
        %vm642 = vcmp.eq.f32.partialorder %v620, inf
        %v643 = vsel %vm642, %v620, %v641
        %vm644 = vcmp.eq.f32.partialorder %v620, 0.0
        %v645 = vand.u32 %v620, 2147483648
        %v646 = vsel %vm644, %v645, %v643
        %v647 = vrsqrt.pop %v621
        %v648 = vmul.f32 %v621, %v647
        %vm649 = vcmp.eq.f32.partialorder %v621, inf
        %v650 = vsel %vm649, %v621, %v648
        %vm651 = vcmp.eq.f32.partialorder %v621, 0.0
        %v652 = vand.u32 %v621, 2147483648
        %v653 = vsel %vm651, %v652, %v650
        %v654 = vrsqrt.pop %v622
        %v655 = vmul.f32 %v622, %v654
        %vm656 = vcmp.eq.f32.partialorder %v622, inf
        %v657 = vsel %vm656, %v622, %v655
        %vm658 = vcmp.eq.f32.partialorder %v622, 0.0
        %v659 = vand.u32 %v622, 2147483648
        %v660 = vsel %vm658, %v659, %v657
        %v661 = vrsqrt.pop %v623
        %v662 = vmul.f32 %v623, %v661
        %vm663 = vcmp.eq.f32.partialorder %v623, inf
        %v664 = vsel %vm663, %v623, %v662
        %vm665 = vcmp.eq.f32.partialorder %v623, 0.0
        %v666 = vand.u32 %v623, 2147483648
        %v667 = vsel %vm665, %v666, %v664
        %v668 = vrsqrt.pop %v624
        %v669 = vmul.f32 %v624, %v668
        %vm670 = vcmp.eq.f32.partialorder %v624, inf
        %v671 = vsel %vm670, %v624, %v669
        %vm672 = vcmp.eq.f32.partialorder %v624, 0.0
        %v673 = vand.u32 %v624, 2147483648
        %v674 = vsel %vm672, %v673, %v671
        %v675 = vrsqrt.pop %v625
        %v676 = vmul.f32 %v625, %v675
        %vm677 = vcmp.eq.f32.partialorder %v625, inf
        %v678 = vsel %vm677, %v625, %v676
        %vm679 = vcmp.eq.f32.partialorder %v625, 0.0
        %v680 = vand.u32 %v625, 2147483648
        %v681 = vsel %vm679, %v680, %v678
        %v682 = vsub.f32 1.0, %v602
        %v683 = vsub.f32 1.0, %v603
        %v684 = vsub.f32 1.0, %v604
        %v685 = vsub.f32 1.0, %v605
        %v686 = vsub.f32 1.0, %v606
        %v687 = vsub.f32 1.0, %v607
        %v688 = vsub.f32 1.0, %v608
        %v689 = vsub.f32 1.0, %v609
        %v690 = vmul.f32 %v632, %v682
        %v691 = vmul.f32 %v639, %v683
        %v692 = vmul.f32 %v646, %v684
        %v693 = vmul.f32 %v653, %v685
        %v694 = vmul.f32 %v660, %v686
        %v695 = vmul.f32 %v667, %v687
        %v696 = vmul.f32 %v674, %v688
        %v697 = vmul.f32 %v681, %v689
        %v698 = vld [vmem:[%s288] sm:$0xff]
        %v699 = vld [vmem:[%s288 + $0x8] sm:$0xff]
        %v700 = vld [vmem:[%s288 + $0x10] sm:$0xff]
        %v701 = vld [vmem:[%s288 + $0x18] sm:$0xff]
        %v702 = vld [vmem:[%s288 + $0x20] sm:$0xff]
        %v703 = vld [vmem:[%s288 + $0x28] sm:$0xff]
        %v704 = vld [vmem:[%s288 + $0x30] sm:$0xff]
        %v705 = vld [vmem:[%s288 + $0x38] sm:$0xff]
        %v706 = vld [vmem:[%s3] sm:$0x1]
        %v707 = vlaneseq
        %v708 = vand.u32 %v707, 127
        %v709 = vlaneseq
        %v710 = vshrl.u32 %v709, 7
        %v711 = vadd.s32 %v710, 8
        %v712 = vadd.s32 %v710, 16
        %v713 = vadd.s32 %v710, 24
        %v714 = vadd.s32 %v710, 32
        %v715 = vadd.s32 %v710, 40
        %v716 = vadd.s32 %v710, 48
        %v717 = vadd.s32 %v710, 56
        %v718 = vstv %s296
        %v719 = vadd.s32 %v718, %v710
        %v720 = vadd.s32 %v718, %v711
        %v721 = vadd.s32 %v718, %v712
        %v722 = vadd.s32 %v718, %v713
        %v723 = vadd.s32 %v718, %v714
        %v724 = vadd.s32 %v718, %v715
        %v725 = vadd.s32 %v718, %v716
        %v726 = vadd.s32 %v718, %v717
        %vm727 = vcmp.lt.s32.totalorder %v708, 8
        %vm728 = vcmp.lt.s32.totalorder %v719, 8
        %vm729 = vcmp.lt.s32.totalorder %v720, 8
        %vm730 = vcmp.lt.s32.totalorder %v721, 8
        %vm731 = vcmp.lt.s32.totalorder %v722, 8
        %vm732 = vcmp.lt.s32.totalorder %v723, 8
        %vm733 = vcmp.lt.s32.totalorder %v724, 8
        %vm734 = vcmp.lt.s32.totalorder %v725, 8
        %vm735 = vcmp.lt.s32.totalorder %v726, 8
        %736 = vset.pattern.permute.xlu0 0
        %737 = vperm.xlu0 %736, %v698
        %v738 = vpop.permute.xlu0 %737
        %739 = vset.pattern.permute.xlu0 0
        %740 = vperm.xlu0 %739, %v699
        %v741 = vpop.permute.xlu0 %740
        %742 = vset.pattern.permute.xlu0 0
        %743 = vperm.xlu0 %742, %v700
        %v744 = vpop.permute.xlu0 %743
        %745 = vset.pattern.permute.xlu0 0
        %746 = vperm.xlu0 %745, %v701
        %v747 = vpop.permute.xlu0 %746
        %748 = vset.pattern.permute.xlu0 0
        %749 = vperm.xlu0 %748, %v702
        %v750 = vpop.permute.xlu0 %749
        %751 = vset.pattern.permute.xlu0 0
        %752 = vperm.xlu0 %751, %v703
        %v753 = vpop.permute.xlu0 %752
        %754 = vset.pattern.permute.xlu0 0
        %755 = vperm.xlu0 %754, %v704
        %v756 = vpop.permute.xlu0 %755
        %757 = vset.pattern.permute.xlu0 0
        %758 = vperm.xlu0 %757, %v705
        %v759 = vpop.permute.xlu0 %758
        %v760 = vlaneseq
        %v761 = vshrl.u32 %v760, 7
        %v762 = vsub.s32 0, %v761
        %v763 = vrot.slane %v706, %v762
        %vm764 = vcmp.eq.s32.totalorder %v738, %v763
        %vm765 = vcmp.eq.s32.totalorder %v741, %v763
        %vm766 = vcmp.eq.s32.totalorder %v744, %v763
        %vm767 = vcmp.eq.s32.totalorder %v747, %v763
        %vm768 = vcmp.eq.s32.totalorder %v750, %v763
        %vm769 = vcmp.eq.s32.totalorder %v753, %v763
        %vm770 = vcmp.eq.s32.totalorder %v756, %v763
        %vm771 = vcmp.eq.s32.totalorder %v759, %v763
        %vm772 = vcmp.ne.s32.totalorder %v719, %v708
        %vm773 = vcmp.ne.s32.totalorder %v720, %v708
        %vm774 = vcmp.ne.s32.totalorder %v721, %v708
        %vm775 = vcmp.ne.s32.totalorder %v722, %v708
        %vm776 = vcmp.ne.s32.totalorder %v723, %v708
        %vm777 = vcmp.ne.s32.totalorder %v724, %v708
        %vm778 = vcmp.ne.s32.totalorder %v725, %v708
        %vm779 = vcmp.ne.s32.totalorder %v726, %v708
        %vm780 = vmand %vm764, %vm772
        %vm781 = vmand %vm765, %vm773
        %vm782 = vmand %vm766, %vm774
        %vm783 = vmand %vm767, %vm775
        %vm784 = vmand %vm768, %vm776
        %vm785 = vmand %vm769, %vm777
        %vm786 = vmand %vm770, %vm778
        %vm787 = vmand %vm771, %vm779
        %v788 = vsel %vm727, 1, 0
        %vm789 = vcmp.eq.s32.totalorder %v788, 1
        %vm790 = vmand %vm780, %vm789
        %vm791 = vmand %vm781, %vm789
        %vm792 = vmand %vm782, %vm789
        %vm793 = vmand %vm783, %vm789
        %vm794 = vmand %vm784, %vm789
        %vm795 = vmand %vm785, %vm789
        %vm796 = vmand %vm786, %vm789
        %vm797 = vmand %vm787, %vm789
        %v798 = vsel %vm728, 1, 0
        %v799 = vsel %vm729, 1, 0
        %v800 = vsel %vm730, 1, 0
        %v801 = vsel %vm731, 1, 0
        %v802 = vsel %vm732, 1, 0
        %v803 = vsel %vm733, 1, 0
        %v804 = vsel %vm734, 1, 0
        %v805 = vsel %vm735, 1, 0
        %vm806 = vcmp.eq.s32.totalorder %v798, 1
        %vm807 = vcmp.eq.s32.totalorder %v799, 1
        %vm808 = vcmp.eq.s32.totalorder %v800, 1
        %vm809 = vcmp.eq.s32.totalorder %v801, 1
        %vm810 = vcmp.eq.s32.totalorder %v802, 1
        %vm811 = vcmp.eq.s32.totalorder %v803, 1
        %vm812 = vcmp.eq.s32.totalorder %v804, 1
        %vm813 = vcmp.eq.s32.totalorder %v805, 1
        %vm814 = vmand %vm790, %vm806
        %vm815 = vmand %vm791, %vm807
        %vm816 = vmand %vm792, %vm808
        %vm817 = vmand %vm793, %vm809
        %vm818 = vmand %vm794, %vm810
        %vm819 = vmand %vm795, %vm811
        %vm820 = vmand %vm796, %vm812
        %vm821 = vmand %vm797, %vm813
        %vm822 = vcmp.ne.s32.totalorder %v738, %v763
        %vm823 = vcmp.ne.s32.totalorder %v741, %v763
        %vm824 = vcmp.ne.s32.totalorder %v744, %v763
        %vm825 = vcmp.ne.s32.totalorder %v747, %v763
        %vm826 = vcmp.ne.s32.totalorder %v750, %v763
        %vm827 = vcmp.ne.s32.totalorder %v753, %v763
        %vm828 = vcmp.ne.s32.totalorder %v756, %v763
        %vm829 = vcmp.ne.s32.totalorder %v759, %v763
        %vm830 = vmand %vm822, %vm789
        %vm831 = vmand %vm823, %vm789
        %vm832 = vmand %vm824, %vm789
        %vm833 = vmand %vm825, %vm789
        %vm834 = vmand %vm826, %vm789
        %vm835 = vmand %vm827, %vm789
        %vm836 = vmand %vm828, %vm789
        %vm837 = vmand %vm829, %vm789
        %v838 = vadd.f32 %v690, 0.1
        %v839 = vadd.f32 %v691, 0.1
        %v840 = vadd.f32 %v692, 0.1
        %v841 = vadd.f32 %v693, 0.1
        %v842 = vadd.f32 %v694, 0.1
        %v843 = vadd.f32 %v695, 0.1
        %v844 = vadd.f32 %v696, 0.1
        %v845 = vadd.f32 %v697, 0.1
        %v846 = vsel %vm814, %v838, -1e+09
        %v847 = vsel %vm815, %v839, -1e+09
        %v848 = vsel %vm816, %v840, -1e+09
        %v849 = vsel %vm817, %v841, -1e+09
        %v850 = vsel %vm818, %v842, -1e+09
        %v851 = vsel %vm819, %v843, -1e+09
        %v852 = vsel %vm820, %v844, -1e+09
        %v853 = vsel %vm821, %v845, -1e+09
        %854 = vst [vmem:[#allocation2] sm:$0xff] %v846
        %855 = vst [vmem:[#allocation2 + $0x8] sm:$0xff] %v847
        %856 = vst [vmem:[#allocation2 + $0x10] sm:$0xff] %v848
        %857 = vst [vmem:[#allocation2 + $0x18] sm:$0xff] %v849
        %858 = vst [vmem:[#allocation2 + $0x20] sm:$0xff] %v850
        %859 = vst [vmem:[#allocation2 + $0x28] sm:$0xff] %v851
        %860 = vst [vmem:[#allocation2 + $0x30] sm:$0xff] %v852
        %861 = vst [vmem:[#allocation2 + $0x38] sm:$0xff] %v853
        %v862 = vsel %vm830, %v690, 1e+09
        %v863 = vsel %vm831, %v691, 1e+09
        %v864 = vsel %vm832, %v692, 1e+09
        %v865 = vsel %vm833, %v693, 1e+09
        %v866 = vsel %vm834, %v694, 1e+09
        %v867 = vsel %vm835, %v695, 1e+09
        %v868 = vsel %vm836, %v696, 1e+09
        %v869 = vsel %vm837, %v697, 1e+09
        %870 = vst [vmem:[#allocation3] sm:$0xff] %v862
        %871 = vst [vmem:[#allocation3 + $0x8] sm:$0xff] %v863
        %872 = vst [vmem:[#allocation3 + $0x10] sm:$0xff] %v864
        %873 = vst [vmem:[#allocation3 + $0x18] sm:$0xff] %v865
        %874 = vst [vmem:[#allocation3 + $0x20] sm:$0xff] %v866
        %875 = vst [vmem:[#allocation3 + $0x28] sm:$0xff] %v867
        %876 = vst [vmem:[#allocation3 + $0x30] sm:$0xff] %v868
        %877 = vst [vmem:[#allocation3 + $0x38] sm:$0xff] %v869
        loop: start=0, step=1, limit=8
        $region45: #{tpu_custom_call.1} parent=43 // loop_pre_header
          _
        $region46: #{tpu_custom_call.1} parent=43 // loop_header
          %s879 = sphi 0, %s883
          %p880 = scmp.ge.s32.totalorder %s879, 8
          %v884 = vphi 0.0, %v2404
          %v885 = vphi 0.0, %v2474
        $region47: #{tpu_custom_call.1} parent=43 // loop_header_branch
          %882 = sbr.rel (%p880) target = $region51
        $region48: #{tpu_custom_call.1} parent=43 // loop_body
          %s886 = smul.u32 %s879, 8
          %s887 = scalar_lea.vmem [#allocation2], %s886
          %v888 = vld [vmem:[%s887] sm:$0xff]
          %s889 = scalar_lea.vmem [#allocation3], %s886
          %v890 = vld [vmem:[%s889] sm:$0xff]
          %891 = vxpose.xlu0.b32.start [1/16] %v888, 128
          %892 = vxpose.xlu0.b32.cont [2/16] 0.0, 128
          %893 = vxpose.xlu0.b32.cont [3/16] 0.0, 128
          %894 = vxpose.xlu0.b32.cont [4/16] 0.0, 128
          %895 = vxpose.xlu0.b32.cont [5/16] 0.0, 128
          %896 = vxpose.xlu0.b32.cont [6/16] 0.0, 128
          %897 = vxpose.xlu0.b32.cont [7/16] 0.0, 128
          %898 = vxpose.xlu0.b32.cont [8/16] 0.0, 128
          %899 = vxpose.xlu0.b32.cont [9/16] 0.0, 128
          %900 = vxpose.xlu0.b32.cont [10/16] 0.0, 128
          %901 = vxpose.xlu0.b32.cont [11/16] 0.0, 128
          %902 = vxpose.xlu0.b32.cont [12/16] 0.0, 128
          %903 = vxpose.xlu0.b32.cont [13/16] 0.0, 128
          %904 = vxpose.xlu0.b32.cont [14/16] 0.0, 128
          %905 = vxpose.xlu0.b32.cont [15/16] 0.0, 128
          %906 = vxpose.xlu0.b32.end [16/16] 0.0, 128
          %v907 = vpop.trf.xlu0
          %v908 = vpop.trf.xlu0
          %v909 = vpop.trf.xlu0
          %v910 = vpop.trf.xlu0
          %v911 = vpop.trf.xlu0
          %v912 = vpop.trf.xlu0
          %v913 = vpop.trf.xlu0
          %v914 = vpop.trf.xlu0
          %v915 = vpop.trf.xlu0
          %v916 = vpop.trf.xlu0
          %v917 = vpop.trf.xlu0
          %v918 = vpop.trf.xlu0
          %v919 = vpop.trf.xlu0
          %v920 = vpop.trf.xlu0
          %v921 = vpop.trf.xlu0
          %v922 = vpop.trf.xlu0
          %924 = vset.pattern.permute.xlu0 0
          %925 = vperm.xlu0 %924, %v907
          %v926 = vpop.permute.xlu0 %925
          %929 = vset.pattern.permute.xlu0 0
          %930 = vperm.xlu0 %929, %v908
          %v931 = vpop.permute.xlu0 %930
          %934 = vset.pattern.permute.xlu0 0
          %935 = vperm.xlu0 %934, %v909
          %v936 = vpop.permute.xlu0 %935
          %939 = vset.pattern.permute.xlu0 0
          %940 = vperm.xlu0 %939, %v910
          %v941 = vpop.permute.xlu0 %940
          %944 = vset.pattern.permute.xlu0 0
          %945 = vperm.xlu0 %944, %v911
          %v946 = vpop.permute.xlu0 %945
          %949 = vset.pattern.permute.xlu0 0
          %950 = vperm.xlu0 %949, %v912
          %v951 = vpop.permute.xlu0 %950
          %954 = vset.pattern.permute.xlu0 0
          %955 = vperm.xlu0 %954, %v913
          %v956 = vpop.permute.xlu0 %955
          %959 = vset.pattern.permute.xlu0 0
          %960 = vperm.xlu0 %959, %v914
          %v961 = vpop.permute.xlu0 %960
          %964 = vset.pattern.permute.xlu0 0
          %965 = vperm.xlu0 %964, %v915
          %v966 = vpop.permute.xlu0 %965
          %969 = vset.pattern.permute.xlu0 0
          %970 = vperm.xlu0 %969, %v916
          %v971 = vpop.permute.xlu0 %970
          %974 = vset.pattern.permute.xlu0 0
          %975 = vperm.xlu0 %974, %v917
          %v976 = vpop.permute.xlu0 %975
          %979 = vset.pattern.permute.xlu0 0
          %980 = vperm.xlu0 %979, %v918
          %v981 = vpop.permute.xlu0 %980
          %984 = vset.pattern.permute.xlu0 0
          %985 = vperm.xlu0 %984, %v919
          %v986 = vpop.permute.xlu0 %985
          %989 = vset.pattern.permute.xlu0 0
          %990 = vperm.xlu0 %989, %v920
          %v991 = vpop.permute.xlu0 %990
          %994 = vset.pattern.permute.xlu0 0
          %995 = vperm.xlu0 %994, %v921
          %v996 = vpop.permute.xlu0 %995
          %999 = vset.pattern.permute.xlu0 0
          %1000 = vperm.xlu0 %999, %v922
          %v1001 = vpop.permute.xlu0 %1000
          %v1003 = vlaneseq
          %v1004 = vshrl.u32 %v1003, 7
          %v1005 = vsub.s32 0, %v1004
          %v1006 = vrot.slane %v890, %v1005
          %v1007 = vsub.f32 %v926, %v1006
          %v1008 = vsub.f32 %v931, %v1006
          %v1009 = vsub.f32 %v936, %v1006
          %v1010 = vsub.f32 %v941, %v1006
          %v1011 = vsub.f32 %v946, %v1006
          %v1012 = vsub.f32 %v951, %v1006
          %v1013 = vsub.f32 %v956, %v1006
          %v1014 = vsub.f32 %v961, %v1006
          %v1015 = vsub.f32 %v966, %v1006
          %v1016 = vsub.f32 %v971, %v1006
          %v1017 = vsub.f32 %v976, %v1006
          %v1018 = vsub.f32 %v981, %v1006
          %v1019 = vsub.f32 %v986, %v1006
          %v1020 = vsub.f32 %v991, %v1006
          %v1021 = vsub.f32 %v996, %v1006
          %v1022 = vsub.f32 %v1001, %v1006
          %v1023 = vmax.f32 %v1007, 0.0
          %v1024 = vmax.f32 %v1008, 0.0
          %v1025 = vmax.f32 %v1009, 0.0
          %v1026 = vmax.f32 %v1010, 0.0
          %v1027 = vmax.f32 %v1011, 0.0
          %v1028 = vmax.f32 %v1012, 0.0
          %v1029 = vmax.f32 %v1013, 0.0
          %v1030 = vmax.f32 %v1014, 0.0
          %v1031 = vmax.f32 %v1015, 0.0
          %v1032 = vmax.f32 %v1016, 0.0
          %v1033 = vmax.f32 %v1017, 0.0
          %v1034 = vmax.f32 %v1018, 0.0
          %v1035 = vmax.f32 %v1019, 0.0
          %v1036 = vmax.f32 %v1020, 0.0
          %v1037 = vmax.f32 %v1021, 0.0
          %v1038 = vmax.f32 %v1022, 0.0
          %v1039 = vadd.f32 %v1023, %v1024
          %v1040 = vadd.f32 %v1039, %v1025
          %v1041 = vadd.f32 %v1040, %v1026
          %v1042 = vadd.f32 %v1041, %v1027
          %v1043 = vadd.f32 %v1042, %v1028
          %v1044 = vadd.f32 %v1043, %v1029
          %v1045 = vadd.f32 %v1044, %v1030
          %v1046 = vadd.f32 %v1045, %v1031
          %v1047 = vadd.f32 %v1046, %v1032
          %v1048 = vadd.f32 %v1047, %v1033
          %v1049 = vadd.f32 %v1048, %v1034
          %v1050 = vadd.f32 %v1049, %v1035
          %v1051 = vadd.f32 %v1050, %v1036
          %v1052 = vadd.f32 %v1051, %v1037
          %v1053 = vadd.f32 %v1052, %v1038
          %v1054 = vrot.slane %v1053, 4
          %v1055 = vadd.f32 %v1053, %v1054
          %v1056 = vrot.slane %v1055, 2
          %v1057 = vadd.f32 %v1055, %v1056
          %v1058 = vrot.slane %v1057, 1
          %v1059 = vadd.f32 %v1057, %v1058
          %v1060 = vadd.f32 %v884, %v1059
          %vm1061 = vcmp.gt.f32.partialorder %v1023, 1e-16
          %vm1062 = vcmp.gt.f32.partialorder %v1024, 1e-16
          %vm1063 = vcmp.gt.f32.partialorder %v1025, 1e-16
          %vm1064 = vcmp.gt.f32.partialorder %v1026, 1e-16
          %vm1065 = vcmp.gt.f32.partialorder %v1027, 1e-16
          %vm1066 = vcmp.gt.f32.partialorder %v1028, 1e-16
          %vm1067 = vcmp.gt.f32.partialorder %v1029, 1e-16
          %vm1068 = vcmp.gt.f32.partialorder %v1030, 1e-16
          %vm1069 = vcmp.gt.f32.partialorder %v1031, 1e-16
          %vm1070 = vcmp.gt.f32.partialorder %v1032, 1e-16
          %vm1071 = vcmp.gt.f32.partialorder %v1033, 1e-16
          %vm1072 = vcmp.gt.f32.partialorder %v1034, 1e-16
          %vm1073 = vcmp.gt.f32.partialorder %v1035, 1e-16
          %vm1074 = vcmp.gt.f32.partialorder %v1036, 1e-16
          %vm1075 = vcmp.gt.f32.partialorder %v1037, 1e-16
          %vm1076 = vcmp.gt.f32.partialorder %v1038, 1e-16
          %v1077 = vsel %vm1061, 1, 0
          %v1078 = vsel %vm1062, 1, 0
          %v1079 = vsel %vm1063, 1, 0
          %v1080 = vsel %vm1064, 1, 0
          %v1081 = vsel %vm1065, 1, 0
          %v1082 = vsel %vm1066, 1, 0
          %v1083 = vsel %vm1067, 1, 0
          %v1084 = vsel %vm1068, 1, 0
          %v1085 = vsel %vm1069, 1, 0
          %v1086 = vsel %vm1070, 1, 0
          %v1087 = vsel %vm1071, 1, 0
          %v1088 = vsel %vm1072, 1, 0
          %v1089 = vsel %vm1073, 1, 0
          %v1090 = vsel %vm1074, 1, 0
          %v1091 = vsel %vm1075, 1, 0
          %v1092 = vsel %vm1076, 1, 0
          %v1093 = vcvt.s32.f32 %v1077
          %v1094 = vcvt.s32.f32 %v1078
          %v1095 = vcvt.s32.f32 %v1079
          %v1096 = vcvt.s32.f32 %v1080
          %v1097 = vcvt.s32.f32 %v1081
          %v1098 = vcvt.s32.f32 %v1082
          %v1099 = vcvt.s32.f32 %v1083
          %v1100 = vcvt.s32.f32 %v1084
          %v1101 = vcvt.s32.f32 %v1085
          %v1102 = vcvt.s32.f32 %v1086
          %v1103 = vcvt.s32.f32 %v1087
          %v1104 = vcvt.s32.f32 %v1088
          %v1105 = vcvt.s32.f32 %v1089
          %v1106 = vcvt.s32.f32 %v1090
          %v1107 = vcvt.s32.f32 %v1091
          %v1108 = vcvt.s32.f32 %v1092
          %v1109 = vadd.f32 %v1093, %v1094
          %v1110 = vadd.f32 %v1109, %v1095
          %v1111 = vadd.f32 %v1110, %v1096
          %v1112 = vadd.f32 %v1111, %v1097
          %v1113 = vadd.f32 %v1112, %v1098
          %v1114 = vadd.f32 %v1113, %v1099
          %v1115 = vadd.f32 %v1114, %v1100
          %v1116 = vadd.f32 %v1115, %v1101
          %v1117 = vadd.f32 %v1116, %v1102
          %v1118 = vadd.f32 %v1117, %v1103
          %v1119 = vadd.f32 %v1118, %v1104
          %v1120 = vadd.f32 %v1119, %v1105
          %v1121 = vadd.f32 %v1120, %v1106
          %v1122 = vadd.f32 %v1121, %v1107
          %v1123 = vadd.f32 %v1122, %v1108
          %v1124 = vrot.slane %v1123, 4
          %v1125 = vadd.f32 %v1123, %v1124
          %v1126 = vrot.slane %v1125, 2
          %v1127 = vadd.f32 %v1125, %v1126
          %v1128 = vrot.slane %v1127, 1
          %v1129 = vadd.f32 %v1127, %v1128
          %v1130 = vadd.f32 %v885, %v1129
          %1131 = vset.pattern.permute.xlu0 1
          %1132 = vperm.xlu0 %1131, %v907
          %v1133 = vpop.permute.xlu0 %1132
          %1135 = vset.pattern.permute.xlu0 1
          %1136 = vperm.xlu0 %1135, %v908
          %v1137 = vpop.permute.xlu0 %1136
          %1139 = vset.pattern.permute.xlu0 1
          %1140 = vperm.xlu0 %1139, %v909
          %v1141 = vpop.permute.xlu0 %1140
          %1143 = vset.pattern.permute.xlu0 1
          %1144 = vperm.xlu0 %1143, %v910
          %v1145 = vpop.permute.xlu0 %1144
          %1147 = vset.pattern.permute.xlu0 1
          %1148 = vperm.xlu0 %1147, %v911
          %v1149 = vpop.permute.xlu0 %1148
          %1151 = vset.pattern.permute.xlu0 1
          %1152 = vperm.xlu0 %1151, %v912
          %v1153 = vpop.permute.xlu0 %1152
          %1155 = vset.pattern.permute.xlu0 1
          %1156 = vperm.xlu0 %1155, %v913
          %v1157 = vpop.permute.xlu0 %1156
          %1159 = vset.pattern.permute.xlu0 1
          %1160 = vperm.xlu0 %1159, %v914
          %v1161 = vpop.permute.xlu0 %1160
          %1163 = vset.pattern.permute.xlu0 1
          %1164 = vperm.xlu0 %1163, %v915
          %v1165 = vpop.permute.xlu0 %1164
          %1167 = vset.pattern.permute.xlu0 1
          %1168 = vperm.xlu0 %1167, %v916
          %v1169 = vpop.permute.xlu0 %1168
          %1171 = vset.pattern.permute.xlu0 1
          %1172 = vperm.xlu0 %1171, %v917
          %v1173 = vpop.permute.xlu0 %1172
          %1175 = vset.pattern.permute.xlu0 1
          %1176 = vperm.xlu0 %1175, %v918
          %v1177 = vpop.permute.xlu0 %1176
          %1179 = vset.pattern.permute.xlu0 1
          %1180 = vperm.xlu0 %1179, %v919
          %v1181 = vpop.permute.xlu0 %1180
          %1183 = vset.pattern.permute.xlu0 1
          %1184 = vperm.xlu0 %1183, %v920
          %v1185 = vpop.permute.xlu0 %1184
          %1187 = vset.pattern.permute.xlu0 1
          %1188 = vperm.xlu0 %1187, %v921
          %v1189 = vpop.permute.xlu0 %1188
          %1191 = vset.pattern.permute.xlu0 1
          %1192 = vperm.xlu0 %1191, %v922
          %v1193 = vpop.permute.xlu0 %1192
          %v1195 = vlaneseq
          %v1196 = vshrl.u32 %v1195, 7
          %v1197 = vsub.s32 1, %v1196
          %v1198 = vrot.slane %v890, %v1197
          %v1199 = vsub.f32 %v1133, %v1198
          %v1200 = vsub.f32 %v1137, %v1198
          %v1201 = vsub.f32 %v1141, %v1198
          %v1202 = vsub.f32 %v1145, %v1198
          %v1203 = vsub.f32 %v1149, %v1198
          %v1204 = vsub.f32 %v1153, %v1198
          %v1205 = vsub.f32 %v1157, %v1198
          %v1206 = vsub.f32 %v1161, %v1198
          %v1207 = vsub.f32 %v1165, %v1198
          %v1208 = vsub.f32 %v1169, %v1198
          %v1209 = vsub.f32 %v1173, %v1198
          %v1210 = vsub.f32 %v1177, %v1198
          %v1211 = vsub.f32 %v1181, %v1198
          %v1212 = vsub.f32 %v1185, %v1198
          %v1213 = vsub.f32 %v1189, %v1198
          %v1214 = vsub.f32 %v1193, %v1198
          %v1215 = vmax.f32 %v1199, 0.0
          %v1216 = vmax.f32 %v1200, 0.0
          %v1217 = vmax.f32 %v1201, 0.0
          %v1218 = vmax.f32 %v1202, 0.0
          %v1219 = vmax.f32 %v1203, 0.0
          %v1220 = vmax.f32 %v1204, 0.0
          %v1221 = vmax.f32 %v1205, 0.0
          %v1222 = vmax.f32 %v1206, 0.0
          %v1223 = vmax.f32 %v1207, 0.0
          %v1224 = vmax.f32 %v1208, 0.0
          %v1225 = vmax.f32 %v1209, 0.0
          %v1226 = vmax.f32 %v1210, 0.0
          %v1227 = vmax.f32 %v1211, 0.0
          %v1228 = vmax.f32 %v1212, 0.0
          %v1229 = vmax.f32 %v1213, 0.0
          %v1230 = vmax.f32 %v1214, 0.0
          %v1231 = vadd.f32 %v1215, %v1216
          %v1232 = vadd.f32 %v1231, %v1217
          %v1233 = vadd.f32 %v1232, %v1218
          %v1234 = vadd.f32 %v1233, %v1219
          %v1235 = vadd.f32 %v1234, %v1220
          %v1236 = vadd.f32 %v1235, %v1221
          %v1237 = vadd.f32 %v1236, %v1222
          %v1238 = vadd.f32 %v1237, %v1223
          %v1239 = vadd.f32 %v1238, %v1224
          %v1240 = vadd.f32 %v1239, %v1225
          %v1241 = vadd.f32 %v1240, %v1226
          %v1242 = vadd.f32 %v1241, %v1227
          %v1243 = vadd.f32 %v1242, %v1228
          %v1244 = vadd.f32 %v1243, %v1229
          %v1245 = vadd.f32 %v1244, %v1230
          %v1246 = vrot.slane %v1245, 4
          %v1247 = vadd.f32 %v1245, %v1246
          %v1248 = vrot.slane %v1247, 2
          %v1249 = vadd.f32 %v1247, %v1248
          %v1250 = vrot.slane %v1249, 1
          %v1251 = vadd.f32 %v1249, %v1250
          %v1252 = vadd.f32 %v1060, %v1251
          %vm1253 = vcmp.gt.f32.partialorder %v1215, 1e-16
          %vm1254 = vcmp.gt.f32.partialorder %v1216, 1e-16
          %vm1255 = vcmp.gt.f32.partialorder %v1217, 1e-16
          %vm1256 = vcmp.gt.f32.partialorder %v1218, 1e-16
          %vm1257 = vcmp.gt.f32.partialorder %v1219, 1e-16
          %vm1258 = vcmp.gt.f32.partialorder %v1220, 1e-16
          %vm1259 = vcmp.gt.f32.partialorder %v1221, 1e-16
          %vm1260 = vcmp.gt.f32.partialorder %v1222, 1e-16
          %vm1261 = vcmp.gt.f32.partialorder %v1223, 1e-16
          %vm1262 = vcmp.gt.f32.partialorder %v1224, 1e-16
          %vm1263 = vcmp.gt.f32.partialorder %v1225, 1e-16
          %vm1264 = vcmp.gt.f32.partialorder %v1226, 1e-16
          %vm1265 = vcmp.gt.f32.partialorder %v1227, 1e-16
          %vm1266 = vcmp.gt.f32.partialorder %v1228, 1e-16
          %vm1267 = vcmp.gt.f32.partialorder %v1229, 1e-16
          %vm1268 = vcmp.gt.f32.partialorder %v1230, 1e-16
          %v1269 = vsel %vm1253, 1, 0
          %v1270 = vsel %vm1254, 1, 0
          %v1271 = vsel %vm1255, 1, 0
          %v1272 = vsel %vm1256, 1, 0
          %v1273 = vsel %vm1257, 1, 0
          %v1274 = vsel %vm1258, 1, 0
          %v1275 = vsel %vm1259, 1, 0
          %v1276 = vsel %vm1260, 1, 0
          %v1277 = vsel %vm1261, 1, 0
          %v1278 = vsel %vm1262, 1, 0
          %v1279 = vsel %vm1263, 1, 0
          %v1280 = vsel %vm1264, 1, 0
          %v1281 = vsel %vm1265, 1, 0
          %v1282 = vsel %vm1266, 1, 0
          %v1283 = vsel %vm1267, 1, 0
          %v1284 = vsel %vm1268, 1, 0
          %v1285 = vcvt.s32.f32 %v1269
          %v1286 = vcvt.s32.f32 %v1270
          %v1287 = vcvt.s32.f32 %v1271
          %v1288 = vcvt.s32.f32 %v1272
          %v1289 = vcvt.s32.f32 %v1273
          %v1290 = vcvt.s32.f32 %v1274
          %v1291 = vcvt.s32.f32 %v1275
          %v1292 = vcvt.s32.f32 %v1276
          %v1293 = vcvt.s32.f32 %v1277
          %v1294 = vcvt.s32.f32 %v1278
          %v1295 = vcvt.s32.f32 %v1279
          %v1296 = vcvt.s32.f32 %v1280
          %v1297 = vcvt.s32.f32 %v1281
          %v1298 = vcvt.s32.f32 %v1282
          %v1299 = vcvt.s32.f32 %v1283
          %v1300 = vcvt.s32.f32 %v1284
          %v1301 = vadd.f32 %v1285, %v1286
          %v1302 = vadd.f32 %v1301, %v1287
          %v1303 = vadd.f32 %v1302, %v1288
          %v1304 = vadd.f32 %v1303, %v1289
          %v1305 = vadd.f32 %v1304, %v1290
          %v1306 = vadd.f32 %v1305, %v1291
          %v1307 = vadd.f32 %v1306, %v1292
          %v1308 = vadd.f32 %v1307, %v1293
          %v1309 = vadd.f32 %v1308, %v1294
          %v1310 = vadd.f32 %v1309, %v1295
          %v1311 = vadd.f32 %v1310, %v1296
          %v1312 = vadd.f32 %v1311, %v1297
          %v1313 = vadd.f32 %v1312, %v1298
          %v1314 = vadd.f32 %v1313, %v1299
          %v1315 = vadd.f32 %v1314, %v1300
          %v1316 = vrot.slane %v1315, 4
          %v1317 = vadd.f32 %v1315, %v1316
          %v1318 = vrot.slane %v1317, 2
          %v1319 = vadd.f32 %v1317, %v1318
          %v1320 = vrot.slane %v1319, 1
          %v1321 = vadd.f32 %v1319, %v1320
          %v1322 = vadd.f32 %v1130, %v1321
          %1323 = vset.pattern.permute.xlu0 2
          %1324 = vperm.xlu0 %1323, %v907
          %v1325 = vpop.permute.xlu0 %1324
          %1327 = vset.pattern.permute.xlu0 2
          %1328 = vperm.xlu0 %1327, %v908
          %v1329 = vpop.permute.xlu0 %1328
          %1331 = vset.pattern.permute.xlu0 2
          %1332 = vperm.xlu0 %1331, %v909
          %v1333 = vpop.permute.xlu0 %1332
          %1335 = vset.pattern.permute.xlu0 2
          %1336 = vperm.xlu0 %1335, %v910
          %v1337 = vpop.permute.xlu0 %1336
          %1339 = vset.pattern.permute.xlu0 2
          %1340 = vperm.xlu0 %1339, %v911
          %v1341 = vpop.permute.xlu0 %1340
          %1343 = vset.pattern.permute.xlu0 2
          %1344 = vperm.xlu0 %1343, %v912
          %v1345 = vpop.permute.xlu0 %1344
          %1347 = vset.pattern.permute.xlu0 2
          %1348 = vperm.xlu0 %1347, %v913
          %v1349 = vpop.permute.xlu0 %1348
          %1351 = vset.pattern.permute.xlu0 2
          %1352 = vperm.xlu0 %1351, %v914
          %v1353 = vpop.permute.xlu0 %1352
          %1355 = vset.pattern.permute.xlu0 2
          %1356 = vperm.xlu0 %1355, %v915
          %v1357 = vpop.permute.xlu0 %1356
          %1359 = vset.pattern.permute.xlu0 2
          %1360 = vperm.xlu0 %1359, %v916
          %v1361 = vpop.permute.xlu0 %1360
          %1363 = vset.pattern.permute.xlu0 2
          %1364 = vperm.xlu0 %1363, %v917
          %v1365 = vpop.permute.xlu0 %1364
          %1367 = vset.pattern.permute.xlu0 2
          %1368 = vperm.xlu0 %1367, %v918
          %v1369 = vpop.permute.xlu0 %1368
          %1371 = vset.pattern.permute.xlu0 2
          %1372 = vperm.xlu0 %1371, %v919
          %v1373 = vpop.permute.xlu0 %1372
          %1375 = vset.pattern.permute.xlu0 2
          %1376 = vperm.xlu0 %1375, %v920
          %v1377 = vpop.permute.xlu0 %1376
          %1379 = vset.pattern.permute.xlu0 2
          %1380 = vperm.xlu0 %1379, %v921
          %v1381 = vpop.permute.xlu0 %1380
          %1383 = vset.pattern.permute.xlu0 2
          %1384 = vperm.xlu0 %1383, %v922
          %v1385 = vpop.permute.xlu0 %1384
          %v1387 = vlaneseq
          %v1388 = vshrl.u32 %v1387, 7
          %v1389 = vsub.s32 2, %v1388
          %v1390 = vrot.slane %v890, %v1389
          %v1391 = vsub.f32 %v1325, %v1390
          %v1392 = vsub.f32 %v1329, %v1390
          %v1393 = vsub.f32 %v1333, %v1390
          %v1394 = vsub.f32 %v1337, %v1390
          %v1395 = vsub.f32 %v1341, %v1390
          %v1396 = vsub.f32 %v1345, %v1390
          %v1397 = vsub.f32 %v1349, %v1390
          %v1398 = vsub.f32 %v1353, %v1390
          %v1399 = vsub.f32 %v1357, %v1390
          %v1400 = vsub.f32 %v1361, %v1390
          %v1401 = vsub.f32 %v1365, %v1390
          %v1402 = vsub.f32 %v1369, %v1390
          %v1403 = vsub.f32 %v1373, %v1390
          %v1404 = vsub.f32 %v1377, %v1390
          %v1405 = vsub.f32 %v1381, %v1390
          %v1406 = vsub.f32 %v1385, %v1390
          %v1407 = vmax.f32 %v1391, 0.0
          %v1408 = vmax.f32 %v1392, 0.0
          %v1409 = vmax.f32 %v1393, 0.0
          %v1410 = vmax.f32 %v1394, 0.0
          %v1411 = vmax.f32 %v1395, 0.0
          %v1412 = vmax.f32 %v1396, 0.0
          %v1413 = vmax.f32 %v1397, 0.0
          %v1414 = vmax.f32 %v1398, 0.0
          %v1415 = vmax.f32 %v1399, 0.0
          %v1416 = vmax.f32 %v1400, 0.0
          %v1417 = vmax.f32 %v1401, 0.0
          %v1418 = vmax.f32 %v1402, 0.0
          %v1419 = vmax.f32 %v1403, 0.0
          %v1420 = vmax.f32 %v1404, 0.0
          %v1421 = vmax.f32 %v1405, 0.0
          %v1422 = vmax.f32 %v1406, 0.0
          %v1423 = vadd.f32 %v1407, %v1408
          %v1424 = vadd.f32 %v1423, %v1409
          %v1425 = vadd.f32 %v1424, %v1410
          %v1426 = vadd.f32 %v1425, %v1411
          %v1427 = vadd.f32 %v1426, %v1412
          %v1428 = vadd.f32 %v1427, %v1413
          %v1429 = vadd.f32 %v1428, %v1414
          %v1430 = vadd.f32 %v1429, %v1415
          %v1431 = vadd.f32 %v1430, %v1416
          %v1432 = vadd.f32 %v1431, %v1417
          %v1433 = vadd.f32 %v1432, %v1418
          %v1434 = vadd.f32 %v1433, %v1419
          %v1435 = vadd.f32 %v1434, %v1420
          %v1436 = vadd.f32 %v1435, %v1421
          %v1437 = vadd.f32 %v1436, %v1422
          %v1438 = vrot.slane %v1437, 4
          %v1439 = vadd.f32 %v1437, %v1438
          %v1440 = vrot.slane %v1439, 2
          %v1441 = vadd.f32 %v1439, %v1440
          %v1442 = vrot.slane %v1441, 1
          %v1443 = vadd.f32 %v1441, %v1442
          %v1444 = vadd.f32 %v1252, %v1443
          %vm1445 = vcmp.gt.f32.partialorder %v1407, 1e-16
          %vm1446 = vcmp.gt.f32.partialorder %v1408, 1e-16
          %vm1447 = vcmp.gt.f32.partialorder %v1409, 1e-16
          %vm1448 = vcmp.gt.f32.partialorder %v1410, 1e-16
          %vm1449 = vcmp.gt.f32.partialorder %v1411, 1e-16
          %vm1450 = vcmp.gt.f32.partialorder %v1412, 1e-16
          %vm1451 = vcmp.gt.f32.partialorder %v1413, 1e-16
          %vm1452 = vcmp.gt.f32.partialorder %v1414, 1e-16
          %vm1453 = vcmp.gt.f32.partialorder %v1415, 1e-16
          %vm1454 = vcmp.gt.f32.partialorder %v1416, 1e-16
          %vm1455 = vcmp.gt.f32.partialorder %v1417, 1e-16
          %vm1456 = vcmp.gt.f32.partialorder %v1418, 1e-16
          %vm1457 = vcmp.gt.f32.partialorder %v1419, 1e-16
          %vm1458 = vcmp.gt.f32.partialorder %v1420, 1e-16
          %vm1459 = vcmp.gt.f32.partialorder %v1421, 1e-16
          %vm1460 = vcmp.gt.f32.partialorder %v1422, 1e-16
          %v1461 = vsel %vm1445, 1, 0
          %v1462 = vsel %vm1446, 1, 0
          %v1463 = vsel %vm1447, 1, 0
          %v1464 = vsel %vm1448, 1, 0
          %v1465 = vsel %vm1449, 1, 0
          %v1466 = vsel %vm1450, 1, 0
          %v1467 = vsel %vm1451, 1, 0
          %v1468 = vsel %vm1452, 1, 0
          %v1469 = vsel %vm1453, 1, 0
          %v1470 = vsel %vm1454, 1, 0
          %v1471 = vsel %vm1455, 1, 0
          %v1472 = vsel %vm1456, 1, 0
          %v1473 = vsel %vm1457, 1, 0
          %v1474 = vsel %vm1458, 1, 0
          %v1475 = vsel %vm1459, 1, 0
          %v1476 = vsel %vm1460, 1, 0
          %v1477 = vcvt.s32.f32 %v1461
          %v1478 = vcvt.s32.f32 %v1462
          %v1479 = vcvt.s32.f32 %v1463
          %v1480 = vcvt.s32.f32 %v1464
          %v1481 = vcvt.s32.f32 %v1465
          %v1482 = vcvt.s32.f32 %v1466
          %v1483 = vcvt.s32.f32 %v1467
          %v1484 = vcvt.s32.f32 %v1468
          %v1485 = vcvt.s32.f32 %v1469
          %v1486 = vcvt.s32.f32 %v1470
          %v1487 = vcvt.s32.f32 %v1471
          %v1488 = vcvt.s32.f32 %v1472
          %v1489 = vcvt.s32.f32 %v1473
          %v1490 = vcvt.s32.f32 %v1474
          %v1491 = vcvt.s32.f32 %v1475
          %v1492 = vcvt.s32.f32 %v1476
          %v1493 = vadd.f32 %v1477, %v1478
          %v1494 = vadd.f32 %v1493, %v1479
          %v1495 = vadd.f32 %v1494, %v1480
          %v1496 = vadd.f32 %v1495, %v1481
          %v1497 = vadd.f32 %v1496, %v1482
          %v1498 = vadd.f32 %v1497, %v1483
          %v1499 = vadd.f32 %v1498, %v1484
          %v1500 = vadd.f32 %v1499, %v1485
          %v1501 = vadd.f32 %v1500, %v1486
          %v1502 = vadd.f32 %v1501, %v1487
          %v1503 = vadd.f32 %v1502, %v1488
          %v1504 = vadd.f32 %v1503, %v1489
          %v1505 = vadd.f32 %v1504, %v1490
          %v1506 = vadd.f32 %v1505, %v1491
          %v1507 = vadd.f32 %v1506, %v1492
          %v1508 = vrot.slane %v1507, 4
          %v1509 = vadd.f32 %v1507, %v1508
          %v1510 = vrot.slane %v1509, 2
          %v1511 = vadd.f32 %v1509, %v1510
          %v1512 = vrot.slane %v1511, 1
          %v1513 = vadd.f32 %v1511, %v1512
          %v1514 = vadd.f32 %v1322, %v1513
          %1515 = vset.pattern.permute.xlu0 3
          %1516 = vperm.xlu0 %1515, %v907
          %v1517 = vpop.permute.xlu0 %1516
          %1519 = vset.pattern.permute.xlu0 3
          %1520 = vperm.xlu0 %1519, %v908
          %v1521 = vpop.permute.xlu0 %1520
          %1523 = vset.pattern.permute.xlu0 3
          %1524 = vperm.xlu0 %1523, %v909
          %v1525 = vpop.permute.xlu0 %1524
          %1527 = vset.pattern.permute.xlu0 3
          %1528 = vperm.xlu0 %1527, %v910
          %v1529 = vpop.permute.xlu0 %1528
          %1531 = vset.pattern.permute.xlu0 3
          %1532 = vperm.xlu0 %1531, %v911
          %v1533 = vpop.permute.xlu0 %1532
          %1535 = vset.pattern.permute.xlu0 3
          %1536 = vperm.xlu0 %1535, %v912
          %v1537 = vpop.permute.xlu0 %1536
          %1539 = vset.pattern.permute.xlu0 3
          %1540 = vperm.xlu0 %1539, %v913
          %v1541 = vpop.permute.xlu0 %1540
          %1543 = vset.pattern.permute.xlu0 3
          %1544 = vperm.xlu0 %1543, %v914
          %v1545 = vpop.permute.xlu0 %1544
          %1547 = vset.pattern.permute.xlu0 3
          %1548 = vperm.xlu0 %1547, %v915
          %v1549 = vpop.permute.xlu0 %1548
          %1551 = vset.pattern.permute.xlu0 3
          %1552 = vperm.xlu0 %1551, %v916
          %v1553 = vpop.permute.xlu0 %1552
          %1555 = vset.pattern.permute.xlu0 3
          %1556 = vperm.xlu0 %1555, %v917
          %v1557 = vpop.permute.xlu0 %1556
          %1559 = vset.pattern.permute.xlu0 3
          %1560 = vperm.xlu0 %1559, %v918
          %v1561 = vpop.permute.xlu0 %1560
          %1563 = vset.pattern.permute.xlu0 3
          %1564 = vperm.xlu0 %1563, %v919
          %v1565 = vpop.permute.xlu0 %1564
          %1567 = vset.pattern.permute.xlu0 3
          %1568 = vperm.xlu0 %1567, %v920
          %v1569 = vpop.permute.xlu0 %1568
          %1571 = vset.pattern.permute.xlu0 3
          %1572 = vperm.xlu0 %1571, %v921
          %v1573 = vpop.permute.xlu0 %1572
          %1575 = vset.pattern.permute.xlu0 3
          %1576 = vperm.xlu0 %1575, %v922
          %v1577 = vpop.permute.xlu0 %1576
          %v1579 = vlaneseq
          %v1580 = vshrl.u32 %v1579, 7
          %v1581 = vsub.s32 3, %v1580
          %v1582 = vrot.slane %v890, %v1581
          %v1583 = vsub.f32 %v1517, %v1582
          %v1584 = vsub.f32 %v1521, %v1582
          %v1585 = vsub.f32 %v1525, %v1582
          %v1586 = vsub.f32 %v1529, %v1582
          %v1587 = vsub.f32 %v1533, %v1582
          %v1588 = vsub.f32 %v1537, %v1582
          %v1589 = vsub.f32 %v1541, %v1582
          %v1590 = vsub.f32 %v1545, %v1582
          %v1591 = vsub.f32 %v1549, %v1582
          %v1592 = vsub.f32 %v1553, %v1582
          %v1593 = vsub.f32 %v1557, %v1582
          %v1594 = vsub.f32 %v1561, %v1582
          %v1595 = vsub.f32 %v1565, %v1582
          %v1596 = vsub.f32 %v1569, %v1582
          %v1597 = vsub.f32 %v1573, %v1582
          %v1598 = vsub.f32 %v1577, %v1582
          %v1599 = vmax.f32 %v1583, 0.0
          %v1600 = vmax.f32 %v1584, 0.0
          %v1601 = vmax.f32 %v1585, 0.0
          %v1602 = vmax.f32 %v1586, 0.0
          %v1603 = vmax.f32 %v1587, 0.0
          %v1604 = vmax.f32 %v1588, 0.0
          %v1605 = vmax.f32 %v1589, 0.0
          %v1606 = vmax.f32 %v1590, 0.0
          %v1607 = vmax.f32 %v1591, 0.0
          %v1608 = vmax.f32 %v1592, 0.0
          %v1609 = vmax.f32 %v1593, 0.0
          %v1610 = vmax.f32 %v1594, 0.0
          %v1611 = vmax.f32 %v1595, 0.0
          %v1612 = vmax.f32 %v1596, 0.0
          %v1613 = vmax.f32 %v1597, 0.0
          %v1614 = vmax.f32 %v1598, 0.0
          %v1615 = vadd.f32 %v1599, %v1600
          %v1616 = vadd.f32 %v1615, %v1601
          %v1617 = vadd.f32 %v1616, %v1602
          %v1618 = vadd.f32 %v1617, %v1603
          %v1619 = vadd.f32 %v1618, %v1604
          %v1620 = vadd.f32 %v1619, %v1605
          %v1621 = vadd.f32 %v1620, %v1606
          %v1622 = vadd.f32 %v1621, %v1607
          %v1623 = vadd.f32 %v1622, %v1608
          %v1624 = vadd.f32 %v1623, %v1609
          %v1625 = vadd.f32 %v1624, %v1610
          %v1626 = vadd.f32 %v1625, %v1611
          %v1627 = vadd.f32 %v1626, %v1612
          %v1628 = vadd.f32 %v1627, %v1613
          %v1629 = vadd.f32 %v1628, %v1614
          %v1630 = vrot.slane %v1629, 4
          %v1631 = vadd.f32 %v1629, %v1630
          %v1632 = vrot.slane %v1631, 2
          %v1633 = vadd.f32 %v1631, %v1632
          %v1634 = vrot.slane %v1633, 1
          %v1635 = vadd.f32 %v1633, %v1634
          %v1636 = vadd.f32 %v1444, %v1635
          %vm1637 = vcmp.gt.f32.partialorder %v1599, 1e-16
          %vm1638 = vcmp.gt.f32.partialorder %v1600, 1e-16
          %vm1639 = vcmp.gt.f32.partialorder %v1601, 1e-16
          %vm1640 = vcmp.gt.f32.partialorder %v1602, 1e-16
          %vm1641 = vcmp.gt.f32.partialorder %v1603, 1e-16
          %vm1642 = vcmp.gt.f32.partialorder %v1604, 1e-16
          %vm1643 = vcmp.gt.f32.partialorder %v1605, 1e-16
          %vm1644 = vcmp.gt.f32.partialorder %v1606, 1e-16
          %vm1645 = vcmp.gt.f32.partialorder %v1607, 1e-16
          %vm1646 = vcmp.gt.f32.partialorder %v1608, 1e-16
          %vm1647 = vcmp.gt.f32.partialorder %v1609, 1e-16
          %vm1648 = vcmp.gt.f32.partialorder %v1610, 1e-16
          %vm1649 = vcmp.gt.f32.partialorder %v1611, 1e-16
          %vm1650 = vcmp.gt.f32.partialorder %v1612, 1e-16
          %vm1651 = vcmp.gt.f32.partialorder %v1613, 1e-16
          %vm1652 = vcmp.gt.f32.partialorder %v1614, 1e-16
          %v1653 = vsel %vm1637, 1, 0
          %v1654 = vsel %vm1638, 1, 0
          %v1655 = vsel %vm1639, 1, 0
          %v1656 = vsel %vm1640, 1, 0
          %v1657 = vsel %vm1641, 1, 0
          %v1658 = vsel %vm1642, 1, 0
          %v1659 = vsel %vm1643, 1, 0
          %v1660 = vsel %vm1644, 1, 0
          %v1661 = vsel %vm1645, 1, 0
          %v1662 = vsel %vm1646, 1, 0
          %v1663 = vsel %vm1647, 1, 0
          %v1664 = vsel %vm1648, 1, 0
          %v1665 = vsel %vm1649, 1, 0
          %v1666 = vsel %vm1650, 1, 0
          %v1667 = vsel %vm1651, 1, 0
          %v1668 = vsel %vm1652, 1, 0
          %v1669 = vcvt.s32.f32 %v1653
          %v1670 = vcvt.s32.f32 %v1654
          %v1671 = vcvt.s32.f32 %v1655
          %v1672 = vcvt.s32.f32 %v1656
          %v1673 = vcvt.s32.f32 %v1657
          %v1674 = vcvt.s32.f32 %v1658
          %v1675 = vcvt.s32.f32 %v1659
          %v1676 = vcvt.s32.f32 %v1660
          %v1677 = vcvt.s32.f32 %v1661
          %v1678 = vcvt.s32.f32 %v1662
          %v1679 = vcvt.s32.f32 %v1663
          %v1680 = vcvt.s32.f32 %v1664
          %v1681 = vcvt.s32.f32 %v1665
          %v1682 = vcvt.s32.f32 %v1666
          %v1683 = vcvt.s32.f32 %v1667
          %v1684 = vcvt.s32.f32 %v1668
          %v1685 = vadd.f32 %v1669, %v1670
          %v1686 = vadd.f32 %v1685, %v1671
          %v1687 = vadd.f32 %v1686, %v1672
          %v1688 = vadd.f32 %v1687, %v1673
          %v1689 = vadd.f32 %v1688, %v1674
          %v1690 = vadd.f32 %v1689, %v1675
          %v1691 = vadd.f32 %v1690, %v1676
          %v1692 = vadd.f32 %v1691, %v1677
          %v1693 = vadd.f32 %v1692, %v1678
          %v1694 = vadd.f32 %v1693, %v1679
          %v1695 = vadd.f32 %v1694, %v1680
          %v1696 = vadd.f32 %v1695, %v1681
          %v1697 = vadd.f32 %v1696, %v1682
          %v1698 = vadd.f32 %v1697, %v1683
          %v1699 = vadd.f32 %v1698, %v1684
          %v1700 = vrot.slane %v1699, 4
          %v1701 = vadd.f32 %v1699, %v1700
          %v1702 = vrot.slane %v1701, 2
          %v1703 = vadd.f32 %v1701, %v1702
          %v1704 = vrot.slane %v1703, 1
          %v1705 = vadd.f32 %v1703, %v1704
          %v1706 = vadd.f32 %v1514, %v1705
          %1707 = vset.pattern.permute.xlu0 4
          %1708 = vperm.xlu0 %1707, %v907
          %v1709 = vpop.permute.xlu0 %1708
          %1711 = vset.pattern.permute.xlu0 4
          %1712 = vperm.xlu0 %1711, %v908
          %v1713 = vpop.permute.xlu0 %1712
          %1715 = vset.pattern.permute.xlu0 4
          %1716 = vperm.xlu0 %1715, %v909
          %v1717 = vpop.permute.xlu0 %1716
          %1719 = vset.pattern.permute.xlu0 4
          %1720 = vperm.xlu0 %1719, %v910
          %v1721 = vpop.permute.xlu0 %1720
          %1723 = vset.pattern.permute.xlu0 4
          %1724 = vperm.xlu0 %1723, %v911
          %v1725 = vpop.permute.xlu0 %1724
          %1727 = vset.pattern.permute.xlu0 4
          %1728 = vperm.xlu0 %1727, %v912
          %v1729 = vpop.permute.xlu0 %1728
          %1731 = vset.pattern.permute.xlu0 4
          %1732 = vperm.xlu0 %1731, %v913
          %v1733 = vpop.permute.xlu0 %1732
          %1735 = vset.pattern.permute.xlu0 4
          %1736 = vperm.xlu0 %1735, %v914
          %v1737 = vpop.permute.xlu0 %1736
          %1739 = vset.pattern.permute.xlu0 4
          %1740 = vperm.xlu0 %1739, %v915
          %v1741 = vpop.permute.xlu0 %1740
          %1743 = vset.pattern.permute.xlu0 4
          %1744 = vperm.xlu0 %1743, %v916
          %v1745 = vpop.permute.xlu0 %1744
          %1747 = vset.pattern.permute.xlu0 4
          %1748 = vperm.xlu0 %1747, %v917
          %v1749 = vpop.permute.xlu0 %1748
          %1751 = vset.pattern.permute.xlu0 4
          %1752 = vperm.xlu0 %1751, %v918
          %v1753 = vpop.permute.xlu0 %1752
          %1755 = vset.pattern.permute.xlu0 4
          %1756 = vperm.xlu0 %1755, %v919
          %v1757 = vpop.permute.xlu0 %1756
          %1759 = vset.pattern.permute.xlu0 4
          %1760 = vperm.xlu0 %1759, %v920
          %v1761 = vpop.permute.xlu0 %1760
          %1763 = vset.pattern.permute.xlu0 4
          %1764 = vperm.xlu0 %1763, %v921
          %v1765 = vpop.permute.xlu0 %1764
          %1767 = vset.pattern.permute.xlu0 4
          %1768 = vperm.xlu0 %1767, %v922
          %v1769 = vpop.permute.xlu0 %1768
          %v1771 = vlaneseq
          %v1772 = vshrl.u32 %v1771, 7
          %v1773 = vsub.s32 4, %v1772
          %v1774 = vrot.slane %v890, %v1773
          %v1775 = vsub.f32 %v1709, %v1774
          %v1776 = vsub.f32 %v1713, %v1774
          %v1777 = vsub.f32 %v1717, %v1774
          %v1778 = vsub.f32 %v1721, %v1774
          %v1779 = vsub.f32 %v1725, %v1774
          %v1780 = vsub.f32 %v1729, %v1774
          %v1781 = vsub.f32 %v1733, %v1774
          %v1782 = vsub.f32 %v1737, %v1774
          %v1783 = vsub.f32 %v1741, %v1774
          %v1784 = vsub.f32 %v1745, %v1774
          %v1785 = vsub.f32 %v1749, %v1774
          %v1786 = vsub.f32 %v1753, %v1774
          %v1787 = vsub.f32 %v1757, %v1774
          %v1788 = vsub.f32 %v1761, %v1774
          %v1789 = vsub.f32 %v1765, %v1774
          %v1790 = vsub.f32 %v1769, %v1774
          %v1791 = vmax.f32 %v1775, 0.0
          %v1792 = vmax.f32 %v1776, 0.0
          %v1793 = vmax.f32 %v1777, 0.0
          %v1794 = vmax.f32 %v1778, 0.0
          %v1795 = vmax.f32 %v1779, 0.0
          %v1796 = vmax.f32 %v1780, 0.0
          %v1797 = vmax.f32 %v1781, 0.0
          %v1798 = vmax.f32 %v1782, 0.0
          %v1799 = vmax.f32 %v1783, 0.0
          %v1800 = vmax.f32 %v1784, 0.0
          %v1801 = vmax.f32 %v1785, 0.0
          %v1802 = vmax.f32 %v1786, 0.0
          %v1803 = vmax.f32 %v1787, 0.0
          %v1804 = vmax.f32 %v1788, 0.0
          %v1805 = vmax.f32 %v1789, 0.0
          %v1806 = vmax.f32 %v1790, 0.0
          %v1807 = vadd.f32 %v1791, %v1792
          %v1808 = vadd.f32 %v1807, %v1793
          %v1809 = vadd.f32 %v1808, %v1794
          %v1810 = vadd.f32 %v1809, %v1795
          %v1811 = vadd.f32 %v1810, %v1796
          %v1812 = vadd.f32 %v1811, %v1797
          %v1813 = vadd.f32 %v1812, %v1798
          %v1814 = vadd.f32 %v1813, %v1799
          %v1815 = vadd.f32 %v1814, %v1800
          %v1816 = vadd.f32 %v1815, %v1801
          %v1817 = vadd.f32 %v1816, %v1802
          %v1818 = vadd.f32 %v1817, %v1803
          %v1819 = vadd.f32 %v1818, %v1804
          %v1820 = vadd.f32 %v1819, %v1805
          %v1821 = vadd.f32 %v1820, %v1806
          %v1822 = vrot.slane %v1821, 4
          %v1823 = vadd.f32 %v1821, %v1822
          %v1824 = vrot.slane %v1823, 2
          %v1825 = vadd.f32 %v1823, %v1824
          %v1826 = vrot.slane %v1825, 1
          %v1827 = vadd.f32 %v1825, %v1826
          %v1828 = vadd.f32 %v1636, %v1827
          %vm1829 = vcmp.gt.f32.partialorder %v1791, 1e-16
          %vm1830 = vcmp.gt.f32.partialorder %v1792, 1e-16
          %vm1831 = vcmp.gt.f32.partialorder %v1793, 1e-16
          %vm1832 = vcmp.gt.f32.partialorder %v1794, 1e-16
          %vm1833 = vcmp.gt.f32.partialorder %v1795, 1e-16
          %vm1834 = vcmp.gt.f32.partialorder %v1796, 1e-16
          %vm1835 = vcmp.gt.f32.partialorder %v1797, 1e-16
          %vm1836 = vcmp.gt.f32.partialorder %v1798, 1e-16
          %vm1837 = vcmp.gt.f32.partialorder %v1799, 1e-16
          %vm1838 = vcmp.gt.f32.partialorder %v1800, 1e-16
          %vm1839 = vcmp.gt.f32.partialorder %v1801, 1e-16
          %vm1840 = vcmp.gt.f32.partialorder %v1802, 1e-16
          %vm1841 = vcmp.gt.f32.partialorder %v1803, 1e-16
          %vm1842 = vcmp.gt.f32.partialorder %v1804, 1e-16
          %vm1843 = vcmp.gt.f32.partialorder %v1805, 1e-16
          %vm1844 = vcmp.gt.f32.partialorder %v1806, 1e-16
          %v1845 = vsel %vm1829, 1, 0
          %v1846 = vsel %vm1830, 1, 0
          %v1847 = vsel %vm1831, 1, 0
          %v1848 = vsel %vm1832, 1, 0
          %v1849 = vsel %vm1833, 1, 0
          %v1850 = vsel %vm1834, 1, 0
          %v1851 = vsel %vm1835, 1, 0
          %v1852 = vsel %vm1836, 1, 0
          %v1853 = vsel %vm1837, 1, 0
          %v1854 = vsel %vm1838, 1, 0
          %v1855 = vsel %vm1839, 1, 0
          %v1856 = vsel %vm1840, 1, 0
          %v1857 = vsel %vm1841, 1, 0
          %v1858 = vsel %vm1842, 1, 0
          %v1859 = vsel %vm1843, 1, 0
          %v1860 = vsel %vm1844, 1, 0
          %v1861 = vcvt.s32.f32 %v1845
          %v1862 = vcvt.s32.f32 %v1846
          %v1863 = vcvt.s32.f32 %v1847
          %v1864 = vcvt.s32.f32 %v1848
          %v1865 = vcvt.s32.f32 %v1849
          %v1866 = vcvt.s32.f32 %v1850
          %v1867 = vcvt.s32.f32 %v1851
          %v1868 = vcvt.s32.f32 %v1852
          %v1869 = vcvt.s32.f32 %v1853
          %v1870 = vcvt.s32.f32 %v1854
          %v1871 = vcvt.s32.f32 %v1855
          %v1872 = vcvt.s32.f32 %v1856
          %v1873 = vcvt.s32.f32 %v1857
          %v1874 = vcvt.s32.f32 %v1858
          %v1875 = vcvt.s32.f32 %v1859
          %v1876 = vcvt.s32.f32 %v1860
          %v1877 = vadd.f32 %v1861, %v1862
          %v1878 = vadd.f32 %v1877, %v1863
          %v1879 = vadd.f32 %v1878, %v1864
          %v1880 = vadd.f32 %v1879, %v1865
          %v1881 = vadd.f32 %v1880, %v1866
          %v1882 = vadd.f32 %v1881, %v1867
          %v1883 = vadd.f32 %v1882, %v1868
          %v1884 = vadd.f32 %v1883, %v1869
          %v1885 = vadd.f32 %v1884, %v1870
          %v1886 = vadd.f32 %v1885, %v1871
          %v1887 = vadd.f32 %v1886, %v1872
          %v1888 = vadd.f32 %v1887, %v1873
          %v1889 = vadd.f32 %v1888, %v1874
          %v1890 = vadd.f32 %v1889, %v1875
          %v1891 = vadd.f32 %v1890, %v1876
          %v1892 = vrot.slane %v1891, 4
          %v1893 = vadd.f32 %v1891, %v1892
          %v1894 = vrot.slane %v1893, 2
          %v1895 = vadd.f32 %v1893, %v1894
          %v1896 = vrot.slane %v1895, 1
          %v1897 = vadd.f32 %v1895, %v1896
          %v1898 = vadd.f32 %v1706, %v1897
          %1899 = vset.pattern.permute.xlu0 5
          %1900 = vperm.xlu0 %1899, %v907
          %v1901 = vpop.permute.xlu0 %1900
          %1903 = vset.pattern.permute.xlu0 5
          %1904 = vperm.xlu0 %1903, %v908
          %v1905 = vpop.permute.xlu0 %1904
          %1907 = vset.pattern.permute.xlu0 5
          %1908 = vperm.xlu0 %1907, %v909
          %v1909 = vpop.permute.xlu0 %1908
          %1911 = vset.pattern.permute.xlu0 5
          %1912 = vperm.xlu0 %1911, %v910
          %v1913 = vpop.permute.xlu0 %1912
          %1915 = vset.pattern.permute.xlu0 5
          %1916 = vperm.xlu0 %1915, %v911
          %v1917 = vpop.permute.xlu0 %1916
          %1919 = vset.pattern.permute.xlu0 5
          %1920 = vperm.xlu0 %1919, %v912
          %v1921 = vpop.permute.xlu0 %1920
          %1923 = vset.pattern.permute.xlu0 5
          %1924 = vperm.xlu0 %1923, %v913
          %v1925 = vpop.permute.xlu0 %1924
          %1927 = vset.pattern.permute.xlu0 5
          %1928 = vperm.xlu0 %1927, %v914
          %v1929 = vpop.permute.xlu0 %1928
          %1931 = vset.pattern.permute.xlu0 5
          %1932 = vperm.xlu0 %1931, %v915
          %v1933 = vpop.permute.xlu0 %1932
          %1935 = vset.pattern.permute.xlu0 5
          %1936 = vperm.xlu0 %1935, %v916
          %v1937 = vpop.permute.xlu0 %1936
          %1939 = vset.pattern.permute.xlu0 5
          %1940 = vperm.xlu0 %1939, %v917
          %v1941 = vpop.permute.xlu0 %1940
          %1943 = vset.pattern.permute.xlu0 5
          %1944 = vperm.xlu0 %1943, %v918
          %v1945 = vpop.permute.xlu0 %1944
          %1947 = vset.pattern.permute.xlu0 5
          %1948 = vperm.xlu0 %1947, %v919
          %v1949 = vpop.permute.xlu0 %1948
          %1951 = vset.pattern.permute.xlu0 5
          %1952 = vperm.xlu0 %1951, %v920
          %v1953 = vpop.permute.xlu0 %1952
          %1955 = vset.pattern.permute.xlu0 5
          %1956 = vperm.xlu0 %1955, %v921
          %v1957 = vpop.permute.xlu0 %1956
          %1959 = vset.pattern.permute.xlu0 5
          %1960 = vperm.xlu0 %1959, %v922
          %v1961 = vpop.permute.xlu0 %1960
          %v1963 = vlaneseq
          %v1964 = vshrl.u32 %v1963, 7
          %v1965 = vsub.s32 5, %v1964
          %v1966 = vrot.slane %v890, %v1965
          %v1967 = vsub.f32 %v1901, %v1966
          %v1968 = vsub.f32 %v1905, %v1966
          %v1969 = vsub.f32 %v1909, %v1966
          %v1970 = vsub.f32 %v1913, %v1966
          %v1971 = vsub.f32 %v1917, %v1966
          %v1972 = vsub.f32 %v1921, %v1966
          %v1973 = vsub.f32 %v1925, %v1966
          %v1974 = vsub.f32 %v1929, %v1966
          %v1975 = vsub.f32 %v1933, %v1966
          %v1976 = vsub.f32 %v1937, %v1966
          %v1977 = vsub.f32 %v1941, %v1966
          %v1978 = vsub.f32 %v1945, %v1966
          %v1979 = vsub.f32 %v1949, %v1966
          %v1980 = vsub.f32 %v1953, %v1966
          %v1981 = vsub.f32 %v1957, %v1966
          %v1982 = vsub.f32 %v1961, %v1966
          %v1983 = vmax.f32 %v1967, 0.0
          %v1984 = vmax.f32 %v1968, 0.0
          %v1985 = vmax.f32 %v1969, 0.0
          %v1986 = vmax.f32 %v1970, 0.0
          %v1987 = vmax.f32 %v1971, 0.0
          %v1988 = vmax.f32 %v1972, 0.0
          %v1989 = vmax.f32 %v1973, 0.0
          %v1990 = vmax.f32 %v1974, 0.0
          %v1991 = vmax.f32 %v1975, 0.0
          %v1992 = vmax.f32 %v1976, 0.0
          %v1993 = vmax.f32 %v1977, 0.0
          %v1994 = vmax.f32 %v1978, 0.0
          %v1995 = vmax.f32 %v1979, 0.0
          %v1996 = vmax.f32 %v1980, 0.0
          %v1997 = vmax.f32 %v1981, 0.0
          %v1998 = vmax.f32 %v1982, 0.0
          %v1999 = vadd.f32 %v1983, %v1984
          %v2000 = vadd.f32 %v1999, %v1985
          %v2001 = vadd.f32 %v2000, %v1986
          %v2002 = vadd.f32 %v2001, %v1987
          %v2003 = vadd.f32 %v2002, %v1988
          %v2004 = vadd.f32 %v2003, %v1989
          %v2005 = vadd.f32 %v2004, %v1990
          %v2006 = vadd.f32 %v2005, %v1991
          %v2007 = vadd.f32 %v2006, %v1992
          %v2008 = vadd.f32 %v2007, %v1993
          %v2009 = vadd.f32 %v2008, %v1994
          %v2010 = vadd.f32 %v2009, %v1995
          %v2011 = vadd.f32 %v2010, %v1996
          %v2012 = vadd.f32 %v2011, %v1997
          %v2013 = vadd.f32 %v2012, %v1998
          %v2014 = vrot.slane %v2013, 4
          %v2015 = vadd.f32 %v2013, %v2014
          %v2016 = vrot.slane %v2015, 2
          %v2017 = vadd.f32 %v2015, %v2016
          %v2018 = vrot.slane %v2017, 1
          %v2019 = vadd.f32 %v2017, %v2018
          %v2020 = vadd.f32 %v1828, %v2019
          %vm2021 = vcmp.gt.f32.partialorder %v1983, 1e-16
          %vm2022 = vcmp.gt.f32.partialorder %v1984, 1e-16
          %vm2023 = vcmp.gt.f32.partialorder %v1985, 1e-16
          %vm2024 = vcmp.gt.f32.partialorder %v1986, 1e-16
          %vm2025 = vcmp.gt.f32.partialorder %v1987, 1e-16
          %vm2026 = vcmp.gt.f32.partialorder %v1988, 1e-16
          %vm2027 = vcmp.gt.f32.partialorder %v1989, 1e-16
          %vm2028 = vcmp.gt.f32.partialorder %v1990, 1e-16
          %vm2029 = vcmp.gt.f32.partialorder %v1991, 1e-16
          %vm2030 = vcmp.gt.f32.partialorder %v1992, 1e-16
          %vm2031 = vcmp.gt.f32.partialorder %v1993, 1e-16
          %vm2032 = vcmp.gt.f32.partialorder %v1994, 1e-16
          %vm2033 = vcmp.gt.f32.partialorder %v1995, 1e-16
          %vm2034 = vcmp.gt.f32.partialorder %v1996, 1e-16
          %vm2035 = vcmp.gt.f32.partialorder %v1997, 1e-16
          %vm2036 = vcmp.gt.f32.partialorder %v1998, 1e-16
          %v2037 = vsel %vm2021, 1, 0
          %v2038 = vsel %vm2022, 1, 0
          %v2039 = vsel %vm2023, 1, 0
          %v2040 = vsel %vm2024, 1, 0
          %v2041 = vsel %vm2025, 1, 0
          %v2042 = vsel %vm2026, 1, 0
          %v2043 = vsel %vm2027, 1, 0
          %v2044 = vsel %vm2028, 1, 0
          %v2045 = vsel %vm2029, 1, 0
          %v2046 = vsel %vm2030, 1, 0
          %v2047 = vsel %vm2031, 1, 0
          %v2048 = vsel %vm2032, 1, 0
          %v2049 = vsel %vm2033, 1, 0
          %v2050 = vsel %vm2034, 1, 0
          %v2051 = vsel %vm2035, 1, 0
          %v2052 = vsel %vm2036, 1, 0
          %v2053 = vcvt.s32.f32 %v2037
          %v2054 = vcvt.s32.f32 %v2038
          %v2055 = vcvt.s32.f32 %v2039
          %v2056 = vcvt.s32.f32 %v2040
          %v2057 = vcvt.s32.f32 %v2041
          %v2058 = vcvt.s32.f32 %v2042
          %v2059 = vcvt.s32.f32 %v2043
          %v2060 = vcvt.s32.f32 %v2044
          %v2061 = vcvt.s32.f32 %v2045
          %v2062 = vcvt.s32.f32 %v2046
          %v2063 = vcvt.s32.f32 %v2047
          %v2064 = vcvt.s32.f32 %v2048
          %v2065 = vcvt.s32.f32 %v2049
          %v2066 = vcvt.s32.f32 %v2050
          %v2067 = vcvt.s32.f32 %v2051
          %v2068 = vcvt.s32.f32 %v2052
          %v2069 = vadd.f32 %v2053, %v2054
          %v2070 = vadd.f32 %v2069, %v2055
          %v2071 = vadd.f32 %v2070, %v2056
          %v2072 = vadd.f32 %v2071, %v2057
          %v2073 = vadd.f32 %v2072, %v2058
          %v2074 = vadd.f32 %v2073, %v2059
          %v2075 = vadd.f32 %v2074, %v2060
          %v2076 = vadd.f32 %v2075, %v2061
          %v2077 = vadd.f32 %v2076, %v2062
          %v2078 = vadd.f32 %v2077, %v2063
          %v2079 = vadd.f32 %v2078, %v2064
          %v2080 = vadd.f32 %v2079, %v2065
          %v2081 = vadd.f32 %v2080, %v2066
          %v2082 = vadd.f32 %v2081, %v2067
          %v2083 = vadd.f32 %v2082, %v2068
          %v2084 = vrot.slane %v2083, 4
          %v2085 = vadd.f32 %v2083, %v2084
          %v2086 = vrot.slane %v2085, 2
          %v2087 = vadd.f32 %v2085, %v2086
          %v2088 = vrot.slane %v2087, 1
          %v2089 = vadd.f32 %v2087, %v2088
          %v2090 = vadd.f32 %v1898, %v2089
          %2091 = vset.pattern.permute.xlu0 6
          %2092 = vperm.xlu0 %2091, %v907
          %v2093 = vpop.permute.xlu0 %2092
          %2095 = vset.pattern.permute.xlu0 6
          %2096 = vperm.xlu0 %2095, %v908
          %v2097 = vpop.permute.xlu0 %2096
          %2099 = vset.pattern.permute.xlu0 6
          %2100 = vperm.xlu0 %2099, %v909
          %v2101 = vpop.permute.xlu0 %2100
          %2103 = vset.pattern.permute.xlu0 6
          %2104 = vperm.xlu0 %2103, %v910
          %v2105 = vpop.permute.xlu0 %2104
          %2107 = vset.pattern.permute.xlu0 6
          %2108 = vperm.xlu0 %2107, %v911
          %v2109 = vpop.permute.xlu0 %2108
          %2111 = vset.pattern.permute.xlu0 6
          %2112 = vperm.xlu0 %2111, %v912
          %v2113 = vpop.permute.xlu0 %2112
          %2115 = vset.pattern.permute.xlu0 6
          %2116 = vperm.xlu0 %2115, %v913
          %v2117 = vpop.permute.xlu0 %2116
          %2119 = vset.pattern.permute.xlu0 6
          %2120 = vperm.xlu0 %2119, %v914
          %v2121 = vpop.permute.xlu0 %2120
          %2123 = vset.pattern.permute.xlu0 6
          %2124 = vperm.xlu0 %2123, %v915
          %v2125 = vpop.permute.xlu0 %2124
          %2127 = vset.pattern.permute.xlu0 6
          %2128 = vperm.xlu0 %2127, %v916
          %v2129 = vpop.permute.xlu0 %2128
          %2131 = vset.pattern.permute.xlu0 6
          %2132 = vperm.xlu0 %2131, %v917
          %v2133 = vpop.permute.xlu0 %2132
          %2135 = vset.pattern.permute.xlu0 6
          %2136 = vperm.xlu0 %2135, %v918
          %v2137 = vpop.permute.xlu0 %2136
          %2139 = vset.pattern.permute.xlu0 6
          %2140 = vperm.xlu0 %2139, %v919
          %v2141 = vpop.permute.xlu0 %2140
          %2143 = vset.pattern.permute.xlu0 6
          %2144 = vperm.xlu0 %2143, %v920
          %v2145 = vpop.permute.xlu0 %2144
          %2147 = vset.pattern.permute.xlu0 6
          %2148 = vperm.xlu0 %2147, %v921
          %v2149 = vpop.permute.xlu0 %2148
          %2151 = vset.pattern.permute.xlu0 6
          %2152 = vperm.xlu0 %2151, %v922
          %v2153 = vpop.permute.xlu0 %2152
          %v2155 = vlaneseq
          %v2156 = vshrl.u32 %v2155, 7
          %v2157 = vsub.s32 6, %v2156
          %v2158 = vrot.slane %v890, %v2157
          %v2159 = vsub.f32 %v2093, %v2158
          %v2160 = vsub.f32 %v2097, %v2158
          %v2161 = vsub.f32 %v2101, %v2158
          %v2162 = vsub.f32 %v2105, %v2158
          %v2163 = vsub.f32 %v2109, %v2158
          %v2164 = vsub.f32 %v2113, %v2158
          %v2165 = vsub.f32 %v2117, %v2158
          %v2166 = vsub.f32 %v2121, %v2158
          %v2167 = vsub.f32 %v2125, %v2158
          %v2168 = vsub.f32 %v2129, %v2158
          %v2169 = vsub.f32 %v2133, %v2158
          %v2170 = vsub.f32 %v2137, %v2158
          %v2171 = vsub.f32 %v2141, %v2158
          %v2172 = vsub.f32 %v2145, %v2158
          %v2173 = vsub.f32 %v2149, %v2158
          %v2174 = vsub.f32 %v2153, %v2158
          %v2175 = vmax.f32 %v2159, 0.0
          %v2176 = vmax.f32 %v2160, 0.0
          %v2177 = vmax.f32 %v2161, 0.0
          %v2178 = vmax.f32 %v2162, 0.0
          %v2179 = vmax.f32 %v2163, 0.0
          %v2180 = vmax.f32 %v2164, 0.0
          %v2181 = vmax.f32 %v2165, 0.0
          %v2182 = vmax.f32 %v2166, 0.0
          %v2183 = vmax.f32 %v2167, 0.0
          %v2184 = vmax.f32 %v2168, 0.0
          %v2185 = vmax.f32 %v2169, 0.0
          %v2186 = vmax.f32 %v2170, 0.0
          %v2187 = vmax.f32 %v2171, 0.0
          %v2188 = vmax.f32 %v2172, 0.0
          %v2189 = vmax.f32 %v2173, 0.0
          %v2190 = vmax.f32 %v2174, 0.0
          %v2191 = vadd.f32 %v2175, %v2176
          %v2192 = vadd.f32 %v2191, %v2177
          %v2193 = vadd.f32 %v2192, %v2178
          %v2194 = vadd.f32 %v2193, %v2179
          %v2195 = vadd.f32 %v2194, %v2180
          %v2196 = vadd.f32 %v2195, %v2181
          %v2197 = vadd.f32 %v2196, %v2182
          %v2198 = vadd.f32 %v2197, %v2183
          %v2199 = vadd.f32 %v2198, %v2184
          %v2200 = vadd.f32 %v2199, %v2185
          %v2201 = vadd.f32 %v2200, %v2186
          %v2202 = vadd.f32 %v2201, %v2187
          %v2203 = vadd.f32 %v2202, %v2188
          %v2204 = vadd.f32 %v2203, %v2189
          %v2205 = vadd.f32 %v2204, %v2190
          %v2206 = vrot.slane %v2205, 4
          %v2207 = vadd.f32 %v2205, %v2206
          %v2208 = vrot.slane %v2207, 2
          %v2209 = vadd.f32 %v2207, %v2208
          %v2210 = vrot.slane %v2209, 1
          %v2211 = vadd.f32 %v2209, %v2210
          %v2212 = vadd.f32 %v2020, %v2211
          %vm2213 = vcmp.gt.f32.partialorder %v2175, 1e-16
          %vm2214 = vcmp.gt.f32.partialorder %v2176, 1e-16
          %vm2215 = vcmp.gt.f32.partialorder %v2177, 1e-16
          %vm2216 = vcmp.gt.f32.partialorder %v2178, 1e-16
          %vm2217 = vcmp.gt.f32.partialorder %v2179, 1e-16
          %vm2218 = vcmp.gt.f32.partialorder %v2180, 1e-16
          %vm2219 = vcmp.gt.f32.partialorder %v2181, 1e-16
          %vm2220 = vcmp.gt.f32.partialorder %v2182, 1e-16
          %vm2221 = vcmp.gt.f32.partialorder %v2183, 1e-16
          %vm2222 = vcmp.gt.f32.partialorder %v2184, 1e-16
          %vm2223 = vcmp.gt.f32.partialorder %v2185, 1e-16
          %vm2224 = vcmp.gt.f32.partialorder %v2186, 1e-16
          %vm2225 = vcmp.gt.f32.partialorder %v2187, 1e-16
          %vm2226 = vcmp.gt.f32.partialorder %v2188, 1e-16
          %vm2227 = vcmp.gt.f32.partialorder %v2189, 1e-16
          %vm2228 = vcmp.gt.f32.partialorder %v2190, 1e-16
          %v2229 = vsel %vm2213, 1, 0
          %v2230 = vsel %vm2214, 1, 0
          %v2231 = vsel %vm2215, 1, 0
          %v2232 = vsel %vm2216, 1, 0
          %v2233 = vsel %vm2217, 1, 0
          %v2234 = vsel %vm2218, 1, 0
          %v2235 = vsel %vm2219, 1, 0
          %v2236 = vsel %vm2220, 1, 0
          %v2237 = vsel %vm2221, 1, 0
          %v2238 = vsel %vm2222, 1, 0
          %v2239 = vsel %vm2223, 1, 0
          %v2240 = vsel %vm2224, 1, 0
          %v2241 = vsel %vm2225, 1, 0
          %v2242 = vsel %vm2226, 1, 0
          %v2243 = vsel %vm2227, 1, 0
          %v2244 = vsel %vm2228, 1, 0
          %v2245 = vcvt.s32.f32 %v2229
          %v2246 = vcvt.s32.f32 %v2230
          %v2247 = vcvt.s32.f32 %v2231
          %v2248 = vcvt.s32.f32 %v2232
          %v2249 = vcvt.s32.f32 %v2233
          %v2250 = vcvt.s32.f32 %v2234
          %v2251 = vcvt.s32.f32 %v2235
          %v2252 = vcvt.s32.f32 %v2236
          %v2253 = vcvt.s32.f32 %v2237
          %v2254 = vcvt.s32.f32 %v2238
          %v2255 = vcvt.s32.f32 %v2239
          %v2256 = vcvt.s32.f32 %v2240
          %v2257 = vcvt.s32.f32 %v2241
          %v2258 = vcvt.s32.f32 %v2242
          %v2259 = vcvt.s32.f32 %v2243
          %v2260 = vcvt.s32.f32 %v2244
          %v2261 = vadd.f32 %v2245, %v2246
          %v2262 = vadd.f32 %v2261, %v2247
          %v2263 = vadd.f32 %v2262, %v2248
          %v2264 = vadd.f32 %v2263, %v2249
          %v2265 = vadd.f32 %v2264, %v2250
          %v2266 = vadd.f32 %v2265, %v2251
          %v2267 = vadd.f32 %v2266, %v2252
          %v2268 = vadd.f32 %v2267, %v2253
          %v2269 = vadd.f32 %v2268, %v2254
          %v2270 = vadd.f32 %v2269, %v2255
          %v2271 = vadd.f32 %v2270, %v2256
          %v2272 = vadd.f32 %v2271, %v2257
          %v2273 = vadd.f32 %v2272, %v2258
          %v2274 = vadd.f32 %v2273, %v2259
          %v2275 = vadd.f32 %v2274, %v2260
          %v2276 = vrot.slane %v2275, 4
          %v2277 = vadd.f32 %v2275, %v2276
          %v2278 = vrot.slane %v2277, 2
          %v2279 = vadd.f32 %v2277, %v2278
          %v2280 = vrot.slane %v2279, 1
          %v2281 = vadd.f32 %v2279, %v2280
          %v2282 = vadd.f32 %v2090, %v2281
          %2283 = vset.pattern.permute.xlu0 7
          %2284 = vperm.xlu0 %2283, %v907
          %v2285 = vpop.permute.xlu0 %2284
          %2287 = vset.pattern.permute.xlu0 7
          %2288 = vperm.xlu0 %2287, %v908
          %v2289 = vpop.permute.xlu0 %2288
          %2291 = vset.pattern.permute.xlu0 7
          %2292 = vperm.xlu0 %2291, %v909
          %v2293 = vpop.permute.xlu0 %2292
          %2295 = vset.pattern.permute.xlu0 7
          %2296 = vperm.xlu0 %2295, %v910
          %v2297 = vpop.permute.xlu0 %2296
          %2299 = vset.pattern.permute.xlu0 7
          %2300 = vperm.xlu0 %2299, %v911
          %v2301 = vpop.permute.xlu0 %2300
          %2303 = vset.pattern.permute.xlu0 7
          %2304 = vperm.xlu0 %2303, %v912
          %v2305 = vpop.permute.xlu0 %2304
          %2307 = vset.pattern.permute.xlu0 7
          %2308 = vperm.xlu0 %2307, %v913
          %v2309 = vpop.permute.xlu0 %2308
          %2311 = vset.pattern.permute.xlu0 7
          %2312 = vperm.xlu0 %2311, %v914
          %v2313 = vpop.permute.xlu0 %2312
          %2315 = vset.pattern.permute.xlu0 7
          %2316 = vperm.xlu0 %2315, %v915
          %v2317 = vpop.permute.xlu0 %2316
          %2319 = vset.pattern.permute.xlu0 7
          %2320 = vperm.xlu0 %2319, %v916
          %v2321 = vpop.permute.xlu0 %2320
          %2323 = vset.pattern.permute.xlu0 7
          %2324 = vperm.xlu0 %2323, %v917
          %v2325 = vpop.permute.xlu0 %2324
          %2327 = vset.pattern.permute.xlu0 7
          %2328 = vperm.xlu0 %2327, %v918
          %v2329 = vpop.permute.xlu0 %2328
          %2331 = vset.pattern.permute.xlu0 7
          %2332 = vperm.xlu0 %2331, %v919
          %v2333 = vpop.permute.xlu0 %2332
          %2335 = vset.pattern.permute.xlu0 7
          %2336 = vperm.xlu0 %2335, %v920
          %v2337 = vpop.permute.xlu0 %2336
          %2339 = vset.pattern.permute.xlu0 7
          %2340 = vperm.xlu0 %2339, %v921
          %v2341 = vpop.permute.xlu0 %2340
          %2343 = vset.pattern.permute.xlu0 7
          %2344 = vperm.xlu0 %2343, %v922
          %v2345 = vpop.permute.xlu0 %2344
          %v2347 = vlaneseq
          %v2348 = vshrl.u32 %v2347, 7
          %v2349 = vsub.s32 7, %v2348
          %v2350 = vrot.slane %v890, %v2349
          %v2351 = vsub.f32 %v2285, %v2350
          %v2352 = vsub.f32 %v2289, %v2350
          %v2353 = vsub.f32 %v2293, %v2350
          %v2354 = vsub.f32 %v2297, %v2350
          %v2355 = vsub.f32 %v2301, %v2350
          %v2356 = vsub.f32 %v2305, %v2350
          %v2357 = vsub.f32 %v2309, %v2350
          %v2358 = vsub.f32 %v2313, %v2350
          %v2359 = vsub.f32 %v2317, %v2350
          %v2360 = vsub.f32 %v2321, %v2350
          %v2361 = vsub.f32 %v2325, %v2350
          %v2362 = vsub.f32 %v2329, %v2350
          %v2363 = vsub.f32 %v2333, %v2350
          %v2364 = vsub.f32 %v2337, %v2350
          %v2365 = vsub.f32 %v2341, %v2350
          %v2366 = vsub.f32 %v2345, %v2350
          %v2367 = vmax.f32 %v2351, 0.0
          %v2368 = vmax.f32 %v2352, 0.0
          %v2369 = vmax.f32 %v2353, 0.0
          %v2370 = vmax.f32 %v2354, 0.0
          %v2371 = vmax.f32 %v2355, 0.0
          %v2372 = vmax.f32 %v2356, 0.0
          %v2373 = vmax.f32 %v2357, 0.0
          %v2374 = vmax.f32 %v2358, 0.0
          %v2375 = vmax.f32 %v2359, 0.0
          %v2376 = vmax.f32 %v2360, 0.0
          %v2377 = vmax.f32 %v2361, 0.0
          %v2378 = vmax.f32 %v2362, 0.0
          %v2379 = vmax.f32 %v2363, 0.0
          %v2380 = vmax.f32 %v2364, 0.0
          %v2381 = vmax.f32 %v2365, 0.0
          %v2382 = vmax.f32 %v2366, 0.0
          %v2383 = vadd.f32 %v2367, %v2368
          %v2384 = vadd.f32 %v2383, %v2369
          %v2385 = vadd.f32 %v2384, %v2370
          %v2386 = vadd.f32 %v2385, %v2371
          %v2387 = vadd.f32 %v2386, %v2372
          %v2388 = vadd.f32 %v2387, %v2373
          %v2389 = vadd.f32 %v2388, %v2374
          %v2390 = vadd.f32 %v2389, %v2375
          %v2391 = vadd.f32 %v2390, %v2376
          %v2392 = vadd.f32 %v2391, %v2377
          %v2393 = vadd.f32 %v2392, %v2378
          %v2394 = vadd.f32 %v2393, %v2379
          %v2395 = vadd.f32 %v2394, %v2380
          %v2396 = vadd.f32 %v2395, %v2381
          %v2397 = vadd.f32 %v2396, %v2382
          %v2398 = vrot.slane %v2397, 4
          %v2399 = vadd.f32 %v2397, %v2398
          %v2400 = vrot.slane %v2399, 2
          %v2401 = vadd.f32 %v2399, %v2400
          %v2402 = vrot.slane %v2401, 1
          %v2403 = vadd.f32 %v2401, %v2402
          %v2404 = vadd.f32 %v2212, %v2403
          %vm2405 = vcmp.gt.f32.partialorder %v2367, 1e-16
          %vm2406 = vcmp.gt.f32.partialorder %v2368, 1e-16
          %vm2407 = vcmp.gt.f32.partialorder %v2369, 1e-16
          %vm2408 = vcmp.gt.f32.partialorder %v2370, 1e-16
          %vm2409 = vcmp.gt.f32.partialorder %v2371, 1e-16
          %vm2410 = vcmp.gt.f32.partialorder %v2372, 1e-16
          %vm2411 = vcmp.gt.f32.partialorder %v2373, 1e-16
          %vm2412 = vcmp.gt.f32.partialorder %v2374, 1e-16
          %vm2413 = vcmp.gt.f32.partialorder %v2375, 1e-16
          %vm2414 = vcmp.gt.f32.partialorder %v2376, 1e-16
          %vm2415 = vcmp.gt.f32.partialorder %v2377, 1e-16
          %vm2416 = vcmp.gt.f32.partialorder %v2378, 1e-16
          %vm2417 = vcmp.gt.f32.partialorder %v2379, 1e-16
          %vm2418 = vcmp.gt.f32.partialorder %v2380, 1e-16
          %vm2419 = vcmp.gt.f32.partialorder %v2381, 1e-16
          %vm2420 = vcmp.gt.f32.partialorder %v2382, 1e-16
          %v2421 = vsel %vm2405, 1, 0
          %v2422 = vsel %vm2406, 1, 0
          %v2423 = vsel %vm2407, 1, 0
          %v2424 = vsel %vm2408, 1, 0
          %v2425 = vsel %vm2409, 1, 0
          %v2426 = vsel %vm2410, 1, 0
          %v2427 = vsel %vm2411, 1, 0
          %v2428 = vsel %vm2412, 1, 0
          %v2429 = vsel %vm2413, 1, 0
          %v2430 = vsel %vm2414, 1, 0
          %v2431 = vsel %vm2415, 1, 0
          %v2432 = vsel %vm2416, 1, 0
          %v2433 = vsel %vm2417, 1, 0
          %v2434 = vsel %vm2418, 1, 0
          %v2435 = vsel %vm2419, 1, 0
          %v2436 = vsel %vm2420, 1, 0
          %v2437 = vcvt.s32.f32 %v2421
          %v2438 = vcvt.s32.f32 %v2422
          %v2439 = vcvt.s32.f32 %v2423
          %v2440 = vcvt.s32.f32 %v2424
          %v2441 = vcvt.s32.f32 %v2425
          %v2442 = vcvt.s32.f32 %v2426
          %v2443 = vcvt.s32.f32 %v2427
          %v2444 = vcvt.s32.f32 %v2428
          %v2445 = vcvt.s32.f32 %v2429
          %v2446 = vcvt.s32.f32 %v2430
          %v2447 = vcvt.s32.f32 %v2431
          %v2448 = vcvt.s32.f32 %v2432
          %v2449 = vcvt.s32.f32 %v2433
          %v2450 = vcvt.s32.f32 %v2434
          %v2451 = vcvt.s32.f32 %v2435
          %v2452 = vcvt.s32.f32 %v2436
          %v2453 = vadd.f32 %v2437, %v2438
          %v2454 = vadd.f32 %v2453, %v2439
          %v2455 = vadd.f32 %v2454, %v2440
          %v2456 = vadd.f32 %v2455, %v2441
          %v2457 = vadd.f32 %v2456, %v2442
          %v2458 = vadd.f32 %v2457, %v2443
          %v2459 = vadd.f32 %v2458, %v2444
          %v2460 = vadd.f32 %v2459, %v2445
          %v2461 = vadd.f32 %v2460, %v2446
          %v2462 = vadd.f32 %v2461, %v2447
          %v2463 = vadd.f32 %v2462, %v2448
          %v2464 = vadd.f32 %v2463, %v2449
          %v2465 = vadd.f32 %v2464, %v2450
          %v2466 = vadd.f32 %v2465, %v2451
          %v2467 = vadd.f32 %v2466, %v2452
          %v2468 = vrot.slane %v2467, 4
          %v2469 = vadd.f32 %v2467, %v2468
          %v2470 = vrot.slane %v2469, 2
          %v2471 = vadd.f32 %v2469, %v2470
          %v2472 = vrot.slane %v2471, 1
          %v2473 = vadd.f32 %v2471, %v2472
          %v2474 = vadd.f32 %v2282, %v2473
        $region49: #{tpu_custom_call.1} parent=43 // loop_footer
          %s883 = sadd.s32 1, %s879
        $region50: #{tpu_custom_call.1} parent=43 // loop_footer_branch
          %878 = sbr.rel target = $region46
        $region51: #{tpu_custom_call.1} parent=43 // loop_exit
          _
        %2475 = vst [vmem:[%s277] sm:$0x1] %v884
        %2476 = vst [vmem:[%s277 + $0x1] sm:$0x1] %v885
        %s2477 = sand.u32 %s169, 1
        %s2478 = scalar_lea.sflag [#allocation5], %s2477
        %s2479 = sand.u32 %s169, 1
        %s2480 = smul.addr %s2479, 2
        %s2481 = scalar_lea.vmem [#allocation4], %s2480
        // Predicated region
        $region52: #{tpu_custom_call.1} parent=43 // pred_check
          %p2482 = pneg %p179
        $region53: #{tpu_custom_call.1} parent=43 // pred_check_branch
          %2484 = sbr.rel (%p2482) target = $region55
        $region54: #{tpu_custom_call.1} parent=43 // pred_region
          %s2486 = ssub.s32 32, 32
          %2487 = vsyncadd %s2478, %s2486
          %s2488 = smul.addr %s20, 32
          %s2489 = scalar_lea.hbm %s6, %s2488
          %s2491 = sshll.u32 %s2481, 4
          %s2492 = int_to_ptr.vmem [resolvable:$true] %s2491
          %2494 = dma.vmem_to_hbm [thread:$0]  %s2492, 32, %s2489, %s2478
        $region55: #{tpu_custom_call.1} parent=43 // pred_fallthru
          _
      $region44: #{tpu_custom_call.1} parent=5 // pred_fallthru
        _
      %p2495 = scmp.le.s32.totalorder 2, %s15
      // Predicated region
      $region56: #{tpu_custom_call.1} parent=5 // pred_check
        %p2496 = pneg %p2495
      $region57: #{tpu_custom_call.1} parent=5 // pred_check_branch
        %2498 = sbr.rel (%p2496) target = $region59
      $region58: #{tpu_custom_call.1} parent=5 // pred_region
        %s2499 = ssub.s32 %s15, 2
        // Predicated region
        $region60: #{tpu_custom_call.1} parent=58 // pred_check
          %p2500 = pneg %p185
        $region61: #{tpu_custom_call.1} parent=58 // pred_check_branch
          %2502 = sbr.rel (%p2500) target = $region63
        $region62: #{tpu_custom_call.1} parent=58 // pred_region
          %s2503 = sand.u32 %s170, 1
          %s2504 = scalar_lea.sflag [#allocation5], %s2503
          %s2505 = sand.u32 %s170, 1
          %s2506 = smul.addr %s2505, 2
          %s2507 = scalar_lea.vmem [#allocation4], %s2506
          %2508 = dma.done %s2504, 32
        $region63: #{tpu_custom_call.1} parent=58 // pred_fallthru
          _
      $region59: #{tpu_custom_call.1} parent=5 // pred_fallthru
        _
    $region6: #{tpu_custom_call.1} parent=1 // loop_footer
      %s19 = sadd.s32 1, %s15
    $region7: #{tpu_custom_call.1} parent=1 // loop_footer_branch
      %14 = sbr.rel target = $region3
    $region8: #{tpu_custom_call.1} parent=1 // loop_exit
      _
    %2509 = vsyncpa [#allocation5], 1
    %s2510 = scalar_lea.sflag [#allocation5], 1
    %2511 = vsyncpa %s2510, 1

</llo_original>
